<compile_context>
chip_gen: v6e
topology: v6e:2x2x1
jax: 0.10.0
libtpu: 0.0.40
codegen_flags: <defaults>
</compile_context>

<pallas_src>
import math

import jax
import jax.numpy as jnp
from jax.experimental import pallas as pl
from jax.experimental.pallas import tpu as pltpu

# ----------------------------- tiny BERT config -----------------------------
VOCAB = 100
TYPE_VOCAB = 2
MAX_POS = 16
HIDDEN = 32
HEADS = 2
HEAD_DIM = HIDDEN // HEADS
INTER = 64
LAYERS = 2
EPS = 1e-12

W_SLAB = 4 * HIDDEN + INTER  # qkv (3H) | attn-out (H) | ffn-in (INTER)


# ------------------------------ kernel helpers ------------------------------
def _layernorm(x, g, b):
    mu = jnp.mean(x, axis=-1, keepdims=True)
    var = jnp.mean((x - mu) ** 2, axis=-1, keepdims=True)
    return (x - mu) * jax.lax.rsqrt(var + EPS) * g + b


def _gelu(x):
    # TODO(synk): HF BERT uses exact erf-GELU; tanh approximation differs by ~1e-3.
    return 0.5 * x * (1.0 + jnp.tanh(0.7978845608028654 * (x + 0.044715 * x * x * x)))


# ------------------------------ fused kernel ---------------------------------
def encoder_kernel(emb_ref, addm_ref, embln_ref, w_in_ref, w_out2_ref,
                   small_ref, o_ref):
    # emb_ref:   (B, S, H)  summed word/pos/type embeddings
    # addm_ref:  (B, S)     additive attention mask (0 or -1e4)
    # embln_ref: (2, H)     embedding LayerNorm gamma / beta
    # w_in_ref:  (L, H, 4H+INTER)   [Wq|Wk|Wv|Wo|Wi] per layer
    # w_out2_ref:(L, INTER, H)      FFN output weight per layer
    # small_ref: (L, 8, 128)  rows: b_qkv, b_o, b_i, b_o2, ln1g, ln1b, ln2g, ln2b
    B, S, H = emb_ref.shape
    addm = addm_ref[...]                                   # (B, S)

    x = emb_ref[...].astype(jnp.float32)                   # (B, S, H)
    x = _layernorm(x, embln_ref[0:1, :], embln_ref[1:2, :])
    xr = x.reshape(B * S, H)                               # activation, VMEM-resident

    scale = 1.0 / math.sqrt(HEAD_DIM)
    for l in range(LAYERS):                                # static unroll
        wmain = w_in_ref[l]                                # (H, 4H+INTER)
        w_qkv = wmain[:, 0:3 * H]
        w_o = wmain[:, 3 * H:4 * H]
        w_i = wmain[:, 4 * H:4 * H + INTER]
        w_o2 = w_out2_ref[l]                               # (INTER, H)

        sm = small_ref[l]                                  # (8, 128)
        b_qkv = sm[0:1, :3 * H]
        b_o = sm[1:2, :H]
        b_i = sm[2:3, :INTER]
        b_o2 = sm[3:4, :H]
        ln1g, ln1b = sm[4:5, :H], sm[5:6, :H]
        ln2g, ln2b = sm[6:7, :H], sm[7:8, :H]

        # Fused QKV projection: one MXU push instead of three.
        qkv = jnp.dot(xr, w_qkv, preferred_element_type=jnp.float32) + b_qkv
        q = qkv[:, 0:H].reshape(B, S, H)
        k = qkv[:, H:2 * H].reshape(B, S, H)
        v = qkv[:, 2 * H:3 * H].reshape(B, S, H)

        # Multi-head attention, batched over B (no per-example grid steps).
        ctx_heads = []
        for h in range(HEADS):                             # static unroll
            sl = slice(h * HEAD_DIM, (h + 1) * HEAD_DIM)
            qh, kh, vh = q[..., sl], k[..., sl], v[..., sl]     # (B, S, HD)
            s = jnp.einsum('bqd,bkd->bqk', qh, kh,
                           preferred_element_type=jnp.float32) * scale
            s = s + addm[:, None, :]
            s = s - jnp.max(s, axis=-1, keepdims=True)
            p = jnp.exp(s)
            p = p * pl.reciprocal(jnp.sum(p, axis=-1, keepdims=True), approx=True)
            ctx_heads.append(jnp.einsum('bqk,bkd->bqd', p, vh,
                                        preferred_element_type=jnp.float32))
        ctx = jnp.concatenate(ctx_heads, axis=-1).reshape(B * S, H)

        attn = jnp.dot(ctx, w_o, preferred_element_type=jnp.float32) + b_o
        x1 = _layernorm(xr + attn, ln1g, ln1b)

        inter = _gelu(jnp.dot(x1, w_i, preferred_element_type=jnp.float32) + b_i)
        ffn = jnp.dot(inter, w_o2, preferred_element_type=jnp.float32) + b_o2
        xr = _layernorm(x1 + ffn, ln2g, ln2b)

    o_ref[...] = xr.reshape(B, S, H).astype(o_ref.dtype)


# ------------------------------ param packing --------------------------------
def pack_params(params):
    """Pack per-layer weights into contiguous slabs (leading LAYERS axis)."""
    w_in = jnp.stack([
        jnp.concatenate(
            [jnp.concatenate([lp["wq"], lp["wk"], lp["wv"]], axis=1),
             lp["wo"], lp["wi"]], axis=1)
        for lp in params["layers"]
    ])                                                    # (L, H, 4H+INTER)
    w_out2 = jnp.stack([lp["wo2"] for lp in params["layers"]])   # (L, INTER, H)

    small_rows = []
    for lp in params["layers"]:
        rows = jnp.zeros((8, 128), jnp.float32)
        rows = rows.at[0, :3 * HIDDEN].set(
            jnp.concatenate([lp["bq"][0], lp["bk"][0], lp["bv"][0]]))
        rows = rows.at[1, :HIDDEN].set(lp["bo"][0])
        rows = rows.at[2, :INTER].set(lp["bi"][0])
        rows = rows.at[3, :HIDDEN].set(lp["bo2"][0])
        rows = rows.at[4, :HIDDEN].set(lp["ln1_g"][0])
        rows = rows.at[5, :HIDDEN].set(lp["ln1_b"][0])
        rows = rows.at[6, :HIDDEN].set(lp["ln2_g"][0])
        rows = rows.at[7, :HIDDEN].set(lp["ln2_b"][0])
        small_rows.append(rows)
    small = jnp.stack(small_rows)                          # (L, 8, 128)

    emb_ln = jnp.concatenate([params["emb_ln_g"], params["emb_ln_b"]], axis=0)
    return w_in, w_out2, small, emb_ln


# ------------------------------- forward pass --------------------------------
def question_encoder(params, input_ids, token_type_ids, attention_mask):
    """Returns last_hidden_state of shape (B, S, HIDDEN)."""
    B, S = input_ids.shape
    # Embedding gathers (glue, plain JAX).
    word = params["word_emb"][input_ids]                   # (B, S, H)
    pos = params["pos_emb"][jnp.arange(S)][None, :, :]     # (1, S, H)
    typ = params["type_emb"][token_type_ids]               # (B, S, H)
    emb = (word + pos + typ).astype(jnp.float32)

    # BERT-style extended additive attention mask: 0 where attended, -1e4 else.
    addm = (1.0 - attention_mask.astype(jnp.float32)) * -1e4   # (B, S)

    w_in, w_out2, small, emb_ln = pack_params(params)

    # One pallas_call, one grid step: whole forward fused, activation stays in
    # VMEM across layers.  (TODO(synk): on v7x a parallel batch axis could use
    # the 2nd TensorCore, but per-step overhead likely exceeds the work here.)
    return pl.pallas_call(
        encoder_kernel,
        out_shape=jax.ShapeDtypeStruct((B, S, HIDDEN), jnp.float32),
        grid=(1,),
        in_specs=[
            pl.BlockSpec((B, S, HIDDEN), lambda i: (0, 0, 0)),
            pl.BlockSpec((B, S), lambda i: (0, 0)),
            pl.BlockSpec((2, HIDDEN), lambda i: (0, 0)),
            pl.BlockSpec((LAYERS, HIDDEN, W_SLAB), lambda i: (0, 0, 0)),
            pl.BlockSpec((LAYERS, INTER, HIDDEN), lambda i: (0, 0, 0)),
            pl.BlockSpec((LAYERS, 8, 128), lambda i: (0, 0, 0)),
        ],
        out_specs=pl.BlockSpec((B, S, HIDDEN), lambda i: (0, 0, 0)),
        compiler_params=pltpu.CompilerParams(dimension_semantics=("arbitrary",)),
    )(emb, addm, emb_ln, w_in, w_out2, small)


# --------------------------- deterministic weights ---------------------------
def init_params(key):
    # TODO(synk): real module loads pretrained BERT via AutoModel; synthesized here.
    std = 0.02
    n_keys = 4 + LAYERS * 6
    keys = iter(jax.random.split(key, n_keys))

    def nrm(k, shape):
        return jax.random.normal(k, shape, dtype=jnp.float32) * std

    params = {
        "word_emb": nrm(next(keys), (VOCAB, HIDDEN)),
        "pos_emb": nrm(next(keys), (MAX_POS, HIDDEN)),
        "type_emb": nrm(next(keys), (TYPE_VOCAB, HIDDEN)),
        "emb_ln_g": jnp.ones((1, HIDDEN), jnp.float32),
        "emb_ln_b": jnp.zeros((1, HIDDEN), jnp.float32),
        "layers": [],
    }
    _ = next(keys)  # reserved
    for _layer in range(LAYERS):
        lp = {
            "wq": nrm(next(keys), (HIDDEN, HIDDEN)),
            "bq": jnp.zeros((1, HIDDEN), jnp.float32),
            "wk": nrm(next(keys), (HIDDEN, HIDDEN)),
            "bk": jnp.zeros((1, HIDDEN), jnp.float32),
            "wv": nrm(next(keys), (HIDDEN, HIDDEN)),
            "bv": jnp.zeros((1, HIDDEN), jnp.float32),
            "wo": nrm(next(keys), (HIDDEN, HIDDEN)),
            "bo": jnp.zeros((1, HIDDEN), jnp.float32),
            "ln1_g": jnp.ones((1, HIDDEN), jnp.float32),
            "ln1_b": jnp.zeros((1, HIDDEN), jnp.float32),
            "wi": nrm(next(keys), (HIDDEN, INTER)),
            "bi": jnp.zeros((1, INTER), jnp.float32),
            "wo2": nrm(next(keys), (INTER, HIDDEN)),
            "bo2": jnp.zeros((1, HIDDEN), jnp.float32),
            "ln2_g": jnp.ones((1, HIDDEN), jnp.float32),
            "ln2_b": jnp.zeros((1, HIDDEN), jnp.float32),
        }
        params["layers"].append(lp)
    return params


# ----------------------------------- main ------------------------------------
if __name__ == "__main__":
    B, S = 2, 8
    key = jax.random.PRNGKey(0)
    k_params, k_ids, k_mask = jax.random.split(key, 3)

    params = init_params(k_params)
    input_ids = jax.random.randint(k_ids, (B, S), 0, VOCAB, dtype=jnp.int32)
    token_type_ids = jnp.zeros((B, S), dtype=jnp.int32)
    attention_mask = jnp.ones((B, S), dtype=jnp.int32)

    out = jax.jit(question_encoder)(params, input_ids, token_type_ids, attention_mask)
    out = jax.block_until_ready(out)
    assert out.shape == (B, S, HIDDEN) and out.dtype == jnp.float32
    assert bool(jnp.all(jnp.isfinite(out)))
    print("KERNEL_OK")
</pallas_src>

<mosaic_0001>
module attributes {stable_mosaic.version = 11 : i64} {
  func.func @encoder_kernel(%arg0: i32, %arg1: memref<2x8x32xf32, #tpu.memory_space<vmem>>, %arg2: memref<2x8xf32, #tpu.memory_space<vmem>>, %arg3: memref<2x32xf32, #tpu.memory_space<vmem>>, %arg4: memref<2x32x192xf32, #tpu.memory_space<vmem>>, %arg5: memref<2x64x32xf32, #tpu.memory_space<vmem>>, %arg6: memref<2x8x128xf32, #tpu.memory_space<vmem>>, %arg7: memref<2x8x32xf32, #tpu.memory_space<vmem>>) attributes {dimension_semantics = [#tpu.dimension_semantics<arbitrary>], iteration_bounds = array<i64: 1>, scalar_prefetch = 0 : i64, scratch_operands = 0 : i64, tpu.core_type = #tpu.core_type<tc>, window_params = [{pipeline_mode = #tpu.pipeline_mode<synchronous>, transform_indices = @transform_0, window_bounds = array<i64: 2, 8, 32>}, {pipeline_mode = #tpu.pipeline_mode<synchronous>, transform_indices = @transform_1, window_bounds = array<i64: 2, 8>}, {pipeline_mode = #tpu.pipeline_mode<synchronous>, transform_indices = @transform_2, window_bounds = array<i64: 2, 32>}, {pipeline_mode = #tpu.pipeline_mode<synchronous>, transform_indices = @transform_3, window_bounds = array<i64: 2, 32, 192>}, {pipeline_mode = #tpu.pipeline_mode<synchronous>, transform_indices = @transform_4, window_bounds = array<i64: 2, 64, 32>}, {pipeline_mode = #tpu.pipeline_mode<synchronous>, transform_indices = @transform_5, window_bounds = array<i64: 2, 8, 128>}, {pipeline_mode = #tpu.pipeline_mode<synchronous>, transform_indices = @transform_6, window_bounds = array<i64: 2, 8, 32>}]} {
    %c0 = arith.constant 0 : index
    %c0_0 = arith.constant 0 : index
    %0 = vector.load %arg2[%c0, %c0_0] : memref<2x8xf32, #tpu.memory_space<vmem>>, vector<2x8xf32>
    %c0_1 = arith.constant 0 : index
    %c0_2 = arith.constant 0 : index
    %c0_3 = arith.constant 0 : index
    %1 = vector.load %arg1[%c0_1, %c0_2, %c0_3] : memref<2x8x32xf32, #tpu.memory_space<vmem>>, vector<2x8x32xf32>
    %c0_4 = arith.constant 0 : index
    %c0_5 = arith.constant 0 : index
    %2 = vector.load %arg3[%c0_4, %c0_5] : memref<2x32xf32, #tpu.memory_space<vmem>>, vector<1x32xf32>
    %c1 = arith.constant 1 : index
    %c0_6 = arith.constant 0 : index
    %3 = vector.load %arg3[%c1, %c0_6] : memref<2x32xf32, #tpu.memory_space<vmem>>, vector<1x32xf32>
    %cst = arith.constant dense<0.000000e+00> : vector<2x8xf32>
    %4 = vector.multi_reduction <add>, %1, %cst [2] : vector<2x8x32xf32> to vector<2x8xf32>
    %5 = vector.shape_cast %4 : vector<2x8xf32> to vector<2x8x1xf32>
    %cst_7 = arith.constant 3.200000e+01 : f32
    %6 = vector.broadcast %cst_7 : f32 to vector<2x8x1xf32>
    %7 = arith.divf %5, %6 : vector<2x8x1xf32>
    %8 = vector.broadcast %7 : vector<2x8x1xf32> to vector<2x8x32xf32>
    %9 = arith.subf %1, %8 : vector<2x8x32xf32>
    %10 = arith.mulf %9, %9 : vector<2x8x32xf32>
    %cst_8 = arith.constant dense<0.000000e+00> : vector<2x8xf32>
    %11 = vector.multi_reduction <add>, %10, %cst_8 [2] : vector<2x8x32xf32> to vector<2x8xf32>
    %12 = vector.shape_cast %11 : vector<2x8xf32> to vector<2x8x1xf32>
    %cst_9 = arith.constant 3.200000e+01 : f32
    %13 = vector.broadcast %cst_9 : f32 to vector<2x8x1xf32>
    %14 = arith.divf %12, %13 : vector<2x8x1xf32>
    %15 = vector.broadcast %7 : vector<2x8x1xf32> to vector<2x8x32xf32>
    %16 = arith.subf %1, %15 : vector<2x8x32xf32>
    %cst_10 = arith.constant 9.99999996E-13 : f32
    %17 = vector.broadcast %cst_10 : f32 to vector<2x8x1xf32>
    %18 = arith.addf %14, %17 : vector<2x8x1xf32>
    %19 = math.rsqrt %18 : vector<2x8x1xf32>
    %20 = vector.broadcast %19 : vector<2x8x1xf32> to vector<2x8x32xf32>
    %21 = arith.mulf %16, %20 : vector<2x8x32xf32>
    %22 = vector.shape_cast %2 : vector<1x32xf32> to vector<1x1x32xf32>
    %23 = vector.broadcast %22 : vector<1x1x32xf32> to vector<2x8x32xf32>
    %24 = arith.mulf %21, %23 : vector<2x8x32xf32>
    %25 = vector.shape_cast %3 : vector<1x32xf32> to vector<1x1x32xf32>
    %26 = vector.broadcast %25 : vector<1x1x32xf32> to vector<2x8x32xf32>
    %27 = arith.addf %24, %26 : vector<2x8x32xf32>
    %28 = vector.shape_cast %27 : vector<2x8x32xf32> to vector<16x32xf32>
    %c0_11 = arith.constant 0 : index
    %c0_12 = arith.constant 0 : index
    %c0_13 = arith.constant 0 : index
    %29 = vector.load %arg4[%c0_11, %c0_12, %c0_13] : memref<2x32x192xf32, #tpu.memory_space<vmem>>, vector<1x32x192xf32>
    %30 = vector.shape_cast %29 : vector<1x32x192xf32> to vector<32x192xf32>
    %31 = vector.extract_strided_slice %30 {offsets = [0, 0], sizes = [32, 96], strides = [1, 1]} : vector<32x192xf32> to vector<32x96xf32>
    %32 = vector.extract_strided_slice %30 {offsets = [0, 96], sizes = [32, 32], strides = [1, 1]} : vector<32x192xf32> to vector<32x32xf32>
    %33 = vector.extract_strided_slice %30 {offsets = [0, 128], sizes = [32, 64], strides = [1, 1]} : vector<32x192xf32> to vector<32x64xf32>
    %c0_14 = arith.constant 0 : index
    %c0_15 = arith.constant 0 : index
    %c0_16 = arith.constant 0 : index
    %34 = vector.load %arg5[%c0_14, %c0_15, %c0_16] : memref<2x64x32xf32, #tpu.memory_space<vmem>>, vector<1x64x32xf32>
    %35 = vector.shape_cast %34 : vector<1x64x32xf32> to vector<64x32xf32>
    %c0_17 = arith.constant 0 : index
    %c0_18 = arith.constant 0 : index
    %c0_19 = arith.constant 0 : index
    %36 = vector.load %arg6[%c0_17, %c0_18, %c0_19] : memref<2x8x128xf32, #tpu.memory_space<vmem>>, vector<1x8x128xf32>
    %37 = vector.shape_cast %36 : vector<1x8x128xf32> to vector<8x128xf32>
    %38 = vector.extract_strided_slice %37 {offsets = [0, 0], sizes = [1, 96], strides = [1, 1]} : vector<8x128xf32> to vector<1x96xf32>
    %39 = vector.extract_strided_slice %37 {offsets = [1, 0], sizes = [1, 32], strides = [1, 1]} : vector<8x128xf32> to vector<1x32xf32>
    %40 = vector.extract_strided_slice %37 {offsets = [2, 0], sizes = [1, 64], strides = [1, 1]} : vector<8x128xf32> to vector<1x64xf32>
    %41 = vector.extract_strided_slice %37 {offsets = [3, 0], sizes = [1, 32], strides = [1, 1]} : vector<8x128xf32> to vector<1x32xf32>
    %42 = vector.extract_strided_slice %37 {offsets = [4, 0], sizes = [1, 32], strides = [1, 1]} : vector<8x128xf32> to vector<1x32xf32>
    %43 = vector.extract_strided_slice %37 {offsets = [5, 0], sizes = [1, 32], strides = [1, 1]} : vector<8x128xf32> to vector<1x32xf32>
    %44 = vector.extract_strided_slice %37 {offsets = [6, 0], sizes = [1, 32], strides = [1, 1]} : vector<8x128xf32> to vector<1x32xf32>
    %45 = vector.extract_strided_slice %37 {offsets = [7, 0], sizes = [1, 32], strides = [1, 1]} : vector<8x128xf32> to vector<1x32xf32>
    %cst_20 = arith.constant dense<0.000000e+00> : vector<16x96xf32>
    %46 = tpu.matmul %28, %31, %cst_20 {dimension_numbers = #tpu.dot_dimension_numbers<[1], [0], [0], [1], [0, 0, 1, 1], [], []>} : vector<16x32xf32>, vector<32x96xf32>, vector<16x96xf32> -> vector<16x96xf32>
    %47 = vector.broadcast %38 : vector<1x96xf32> to vector<16x96xf32>
    %48 = arith.addf %46, %47 : vector<16x96xf32>
    %49 = vector.extract_strided_slice %48 {offsets = [0, 0], sizes = [16, 32], strides = [1, 1]} : vector<16x96xf32> to vector<16x32xf32>
    %50 = vector.shape_cast %49 : vector<16x32xf32> to vector<2x8x32xf32>
    %51 = vector.extract_strided_slice %48 {offsets = [0, 32], sizes = [16, 32], strides = [1, 1]} : vector<16x96xf32> to vector<16x32xf32>
    %52 = vector.shape_cast %51 : vector<16x32xf32> to vector<2x8x32xf32>
    %53 = vector.extract_strided_slice %48 {offsets = [0, 64], sizes = [16, 32], strides = [1, 1]} : vector<16x96xf32> to vector<16x32xf32>
    %54 = vector.shape_cast %53 : vector<16x32xf32> to vector<2x8x32xf32>
    %55 = vector.extract_strided_slice %50 {offsets = [0, 0, 0], sizes = [2, 8, 16], strides = [1, 1, 1]} : vector<2x8x32xf32> to vector<2x8x16xf32>
    %56 = vector.extract_strided_slice %52 {offsets = [0, 0, 0], sizes = [2, 8, 16], strides = [1, 1, 1]} : vector<2x8x32xf32> to vector<2x8x16xf32>
    %57 = vector.extract_strided_slice %54 {offsets = [0, 0, 0], sizes = [2, 8, 16], strides = [1, 1, 1]} : vector<2x8x32xf32> to vector<2x8x16xf32>
    "tpu.trace_start"() <{level = 10 : i32, message = "bqd,bkd->bqk"}> : () -> ()
    %cst_21 = arith.constant dense<0.000000e+00> : vector<2x8x8xf32>
    %58 = tpu.matmul %55, %56, %cst_21 {dimension_numbers = #tpu.dot_dimension_numbers<[2], [2], [1], [1], [0, 0, 0, 1, 1, 1], [0], [0]>} : vector<2x8x16xf32>, vector<2x8x16xf32>, vector<2x8x8xf32> -> vector<2x8x8xf32>
    "tpu.trace_stop"() : () -> ()
    %cst_22 = arith.constant 2.500000e-01 : f32
    %59 = vector.broadcast %cst_22 : f32 to vector<2x8x8xf32>
    %60 = arith.mulf %58, %59 : vector<2x8x8xf32>
    %61 = vector.shape_cast %0 : vector<2x8xf32> to vector<2x1x8xf32>
    %62 = vector.broadcast %61 : vector<2x1x8xf32> to vector<2x8x8xf32>
    %63 = arith.addf %60, %62 : vector<2x8x8xf32>
    %cst_23 = arith.constant dense<0xFF800000> : vector<2x8xf32>
    %64 = vector.multi_reduction <maximumf>, %63, %cst_23 [2] : vector<2x8x8xf32> to vector<2x8xf32>
    %65 = vector.shape_cast %64 : vector<2x8xf32> to vector<2x8x1xf32>
    %66 = vector.broadcast %65 : vector<2x8x1xf32> to vector<2x8x8xf32>
    %67 = arith.subf %63, %66 : vector<2x8x8xf32>
    %68 = math.exp %67 : vector<2x8x8xf32>
    %cst_24 = arith.constant dense<0.000000e+00> : vector<2x8xf32>
    %69 = vector.multi_reduction <add>, %68, %cst_24 [2] : vector<2x8x8xf32> to vector<2x8xf32>
    %70 = vector.shape_cast %69 : vector<2x8xf32> to vector<2x8x1xf32>
    %71 = tpu.reciprocal %70 {approx = true} : vector<2x8x1xf32> -> vector<2x8x1xf32>
    %72 = vector.broadcast %71 : vector<2x8x1xf32> to vector<2x8x8xf32>
    %73 = arith.mulf %68, %72 : vector<2x8x8xf32>
    "tpu.trace_start"() <{level = 10 : i32, message = "bqk,bkd->bqd"}> : () -> ()
    %cst_25 = arith.constant dense<0.000000e+00> : vector<2x8x16xf32>
    %74 = tpu.matmul %73, %57, %cst_25 {dimension_numbers = #tpu.dot_dimension_numbers<[2], [1], [1], [2], [0, 0, 0, 1, 1, 2], [0], [0]>} : vector<2x8x8xf32>, vector<2x8x16xf32>, vector<2x8x16xf32> -> vector<2x8x16xf32>
    "tpu.trace_stop"() : () -> ()
    %75 = vector.extract_strided_slice %50 {offsets = [0, 0, 16], sizes = [2, 8, 16], strides = [1, 1, 1]} : vector<2x8x32xf32> to vector<2x8x16xf32>
    %76 = vector.extract_strided_slice %52 {offsets = [0, 0, 16], sizes = [2, 8, 16], strides = [1, 1, 1]} : vector<2x8x32xf32> to vector<2x8x16xf32>
    %77 = vector.extract_strided_slice %54 {offsets = [0, 0, 16], sizes = [2, 8, 16], strides = [1, 1, 1]} : vector<2x8x32xf32> to vector<2x8x16xf32>
    "tpu.trace_start"() <{level = 10 : i32, message = "bqd,bkd->bqk"}> : () -> ()
    %cst_26 = arith.constant dense<0.000000e+00> : vector<2x8x8xf32>
    %78 = tpu.matmul %75, %76, %cst_26 {dimension_numbers = #tpu.dot_dimension_numbers<[2], [2], [1], [1], [0, 0, 0, 1, 1, 1], [0], [0]>} : vector<2x8x16xf32>, vector<2x8x16xf32>, vector<2x8x8xf32> -> vector<2x8x8xf32>
    "tpu.trace_stop"() : () -> ()
    %cst_27 = arith.constant 2.500000e-01 : f32
    %79 = vector.broadcast %cst_27 : f32 to vector<2x8x8xf32>
    %80 = arith.mulf %78, %79 : vector<2x8x8xf32>
    %81 = vector.shape_cast %0 : vector<2x8xf32> to vector<2x1x8xf32>
    %82 = vector.broadcast %81 : vector<2x1x8xf32> to vector<2x8x8xf32>
    %83 = arith.addf %80, %82 : vector<2x8x8xf32>
    %cst_28 = arith.constant dense<0xFF800000> : vector<2x8xf32>
    %84 = vector.multi_reduction <maximumf>, %83, %cst_28 [2] : vector<2x8x8xf32> to vector<2x8xf32>
    %85 = vector.shape_cast %84 : vector<2x8xf32> to vector<2x8x1xf32>
    %86 = vector.broadcast %85 : vector<2x8x1xf32> to vector<2x8x8xf32>
    %87 = arith.subf %83, %86 : vector<2x8x8xf32>
    %88 = math.exp %87 : vector<2x8x8xf32>
    %cst_29 = arith.constant dense<0.000000e+00> : vector<2x8xf32>
    %89 = vector.multi_reduction <add>, %88, %cst_29 [2] : vector<2x8x8xf32> to vector<2x8xf32>
    %90 = vector.shape_cast %89 : vector<2x8xf32> to vector<2x8x1xf32>
    %91 = tpu.reciprocal %90 {approx = true} : vector<2x8x1xf32> -> vector<2x8x1xf32>
    %92 = vector.broadcast %91 : vector<2x8x1xf32> to vector<2x8x8xf32>
    %93 = arith.mulf %88, %92 : vector<2x8x8xf32>
    "tpu.trace_start"() <{level = 10 : i32, message = "bqk,bkd->bqd"}> : () -> ()
    %cst_30 = arith.constant dense<0.000000e+00> : vector<2x8x16xf32>
    %94 = tpu.matmul %93, %77, %cst_30 {dimension_numbers = #tpu.dot_dimension_numbers<[2], [1], [1], [2], [0, 0, 0, 1, 1, 2], [0], [0]>} : vector<2x8x8xf32>, vector<2x8x16xf32>, vector<2x8x16xf32> -> vector<2x8x16xf32>
    "tpu.trace_stop"() : () -> ()
    %95 = tpu.concatenate %74, %94 in 2 : vector<2x8x16xf32>, vector<2x8x16xf32> -> vector<2x8x32xf32>
    %96 = vector.shape_cast %95 : vector<2x8x32xf32> to vector<16x32xf32>
    %cst_31 = arith.constant dense<0.000000e+00> : vector<16x32xf32>
    %97 = tpu.matmul %96, %32, %cst_31 {dimension_numbers = #tpu.dot_dimension_numbers<[1], [0], [0], [1], [0, 0, 1, 1], [], []>} : vector<16x32xf32>, vector<32x32xf32>, vector<16x32xf32> -> vector<16x32xf32>
    %98 = vector.broadcast %39 : vector<1x32xf32> to vector<16x32xf32>
    %99 = arith.addf %97, %98 : vector<16x32xf32>
    %100 = arith.addf %28, %99 : vector<16x32xf32>
    %cst_32 = arith.constant dense<0.000000e+00> : vector<16xf32>
    %101 = vector.multi_reduction <add>, %100, %cst_32 [1] : vector<16x32xf32> to vector<16xf32>
    %102 = vector.shape_cast %101 : vector<16xf32> to vector<16x1xf32>
    %cst_33 = arith.constant 3.200000e+01 : f32
    %103 = vector.broadcast %cst_33 : f32 to vector<16x1xf32>
    %104 = arith.divf %102, %103 : vector<16x1xf32>
    %105 = vector.broadcast %104 : vector<16x1xf32> to vector<16x32xf32>
    %106 = arith.subf %100, %105 : vector<16x32xf32>
    %107 = arith.mulf %106, %106 : vector<16x32xf32>
    %cst_34 = arith.constant dense<0.000000e+00> : vector<16xf32>
    %108 = vector.multi_reduction <add>, %107, %cst_34 [1] : vector<16x32xf32> to vector<16xf32>
    %109 = vector.shape_cast %108 : vector<16xf32> to vector<16x1xf32>
    %cst_35 = arith.constant 3.200000e+01 : f32
    %110 = vector.broadcast %cst_35 : f32 to vector<16x1xf32>
    %111 = arith.divf %109, %110 : vector<16x1xf32>
    %112 = vector.broadcast %104 : vector<16x1xf32> to vector<16x32xf32>
    %113 = arith.subf %100, %112 : vector<16x32xf32>
    %cst_36 = arith.constant 9.99999996E-13 : f32
    %114 = vector.broadcast %cst_36 : f32 to vector<16x1xf32>
    %115 = arith.addf %111, %114 : vector<16x1xf32>
    %116 = math.rsqrt %115 : vector<16x1xf32>
    %117 = vector.broadcast %116 : vector<16x1xf32> to vector<16x32xf32>
    %118 = arith.mulf %113, %117 : vector<16x32xf32>
    %119 = vector.broadcast %42 : vector<1x32xf32> to vector<16x32xf32>
    %120 = arith.mulf %118, %119 : vector<16x32xf32>
    %121 = vector.broadcast %43 : vector<1x32xf32> to vector<16x32xf32>
    %122 = arith.addf %120, %121 : vector<16x32xf32>
    %cst_37 = arith.constant dense<0.000000e+00> : vector<16x64xf32>
    %123 = tpu.matmul %122, %33, %cst_37 {dimension_numbers = #tpu.dot_dimension_numbers<[1], [0], [0], [1], [0, 0, 1, 1], [], []>} : vector<16x32xf32>, vector<32x64xf32>, vector<16x64xf32> -> vector<16x64xf32>
    %124 = vector.broadcast %40 : vector<1x64xf32> to vector<16x64xf32>
    %125 = arith.addf %123, %124 : vector<16x64xf32>
    %cst_38 = arith.constant 5.000000e-01 : f32
    %126 = vector.broadcast %cst_38 : f32 to vector<16x64xf32>
    %127 = arith.mulf %126, %125 : vector<16x64xf32>
    %cst_39 = arith.constant 4.471500e-02 : f32
    %128 = vector.broadcast %cst_39 : f32 to vector<16x64xf32>
    %129 = arith.mulf %128, %125 : vector<16x64xf32>
    %130 = arith.mulf %129, %125 : vector<16x64xf32>
    %131 = arith.mulf %130, %125 : vector<16x64xf32>
    %132 = arith.addf %125, %131 : vector<16x64xf32>
    %cst_40 = arith.constant 0.797884583 : f32
    %133 = vector.broadcast %cst_40 : f32 to vector<16x64xf32>
    %134 = arith.mulf %133, %132 : vector<16x64xf32>
    %135 = math.tanh %134 : vector<16x64xf32>
    %cst_41 = arith.constant 1.000000e+00 : f32
    %136 = vector.broadcast %cst_41 : f32 to vector<16x64xf32>
    %137 = arith.addf %136, %135 : vector<16x64xf32>
    %138 = arith.mulf %127, %137 : vector<16x64xf32>
    %cst_42 = arith.constant dense<0.000000e+00> : vector<16x32xf32>
    %139 = tpu.matmul %138, %35, %cst_42 {dimension_numbers = #tpu.dot_dimension_numbers<[1], [0], [0], [1], [0, 0, 1, 1], [], []>} : vector<16x64xf32>, vector<64x32xf32>, vector<16x32xf32> -> vector<16x32xf32>
    %140 = vector.broadcast %41 : vector<1x32xf32> to vector<16x32xf32>
    %141 = arith.addf %139, %140 : vector<16x32xf32>
    %142 = arith.addf %122, %141 : vector<16x32xf32>
    %cst_43 = arith.constant dense<0.000000e+00> : vector<16xf32>
    %143 = vector.multi_reduction <add>, %142, %cst_43 [1] : vector<16x32xf32> to vector<16xf32>
    %144 = vector.shape_cast %143 : vector<16xf32> to vector<16x1xf32>
    %cst_44 = arith.constant 3.200000e+01 : f32
    %145 = vector.broadcast %cst_44 : f32 to vector<16x1xf32>
    %146 = arith.divf %144, %145 : vector<16x1xf32>
    %147 = vector.broadcast %146 : vector<16x1xf32> to vector<16x32xf32>
    %148 = arith.subf %142, %147 : vector<16x32xf32>
    %149 = arith.mulf %148, %148 : vector<16x32xf32>
    %cst_45 = arith.constant dense<0.000000e+00> : vector<16xf32>
    %150 = vector.multi_reduction <add>, %149, %cst_45 [1] : vector<16x32xf32> to vector<16xf32>
    %151 = vector.shape_cast %150 : vector<16xf32> to vector<16x1xf32>
    %cst_46 = arith.constant 3.200000e+01 : f32
    %152 = vector.broadcast %cst_46 : f32 to vector<16x1xf32>
    %153 = arith.divf %151, %152 : vector<16x1xf32>
    %154 = vector.broadcast %146 : vector<16x1xf32> to vector<16x32xf32>
    %155 = arith.subf %142, %154 : vector<16x32xf32>
    %cst_47 = arith.constant 9.99999996E-13 : f32
    %156 = vector.broadcast %cst_47 : f32 to vector<16x1xf32>
    %157 = arith.addf %153, %156 : vector<16x1xf32>
    %158 = math.rsqrt %157 : vector<16x1xf32>
    %159 = vector.broadcast %158 : vector<16x1xf32> to vector<16x32xf32>
    %160 = arith.mulf %155, %159 : vector<16x32xf32>
    %161 = vector.broadcast %44 : vector<1x32xf32> to vector<16x32xf32>
    %162 = arith.mulf %160, %161 : vector<16x32xf32>
    %163 = vector.broadcast %45 : vector<1x32xf32> to vector<16x32xf32>
    %164 = arith.addf %162, %163 : vector<16x32xf32>
    %c1_48 = arith.constant 1 : index
    %c0_49 = arith.constant 0 : index
    %c0_50 = arith.constant 0 : index
    %165 = vector.load %arg4[%c1_48, %c0_49, %c0_50] : memref<2x32x192xf32, #tpu.memory_space<vmem>>, vector<1x32x192xf32>
    %166 = vector.shape_cast %165 : vector<1x32x192xf32> to vector<32x192xf32>
    %167 = vector.extract_strided_slice %166 {offsets = [0, 0], sizes = [32, 96], strides = [1, 1]} : vector<32x192xf32> to vector<32x96xf32>
    %168 = vector.extract_strided_slice %166 {offsets = [0, 96], sizes = [32, 32], strides = [1, 1]} : vector<32x192xf32> to vector<32x32xf32>
    %169 = vector.extract_strided_slice %166 {offsets = [0, 128], sizes = [32, 64], strides = [1, 1]} : vector<32x192xf32> to vector<32x64xf32>
    %c1_51 = arith.constant 1 : index
    %c0_52 = arith.constant 0 : index
    %c0_53 = arith.constant 0 : index
    %170 = vector.load %arg5[%c1_51, %c0_52, %c0_53] : memref<2x64x32xf32, #tpu.memory_space<vmem>>, vector<1x64x32xf32>
    %171 = vector.shape_cast %170 : vector<1x64x32xf32> to vector<64x32xf32>
    %c1_54 = arith.constant 1 : index
    %c0_55 = arith.constant 0 : index
    %c0_56 = arith.constant 0 : index
    %172 = vector.load %arg6[%c1_54, %c0_55, %c0_56] : memref<2x8x128xf32, #tpu.memory_space<vmem>>, vector<1x8x128xf32>
    %173 = vector.shape_cast %172 : vector<1x8x128xf32> to vector<8x128xf32>
    %174 = vector.extract_strided_slice %173 {offsets = [0, 0], sizes = [1, 96], strides = [1, 1]} : vector<8x128xf32> to vector<1x96xf32>
    %175 = vector.extract_strided_slice %173 {offsets = [1, 0], sizes = [1, 32], strides = [1, 1]} : vector<8x128xf32> to vector<1x32xf32>
    %176 = vector.extract_strided_slice %173 {offsets = [2, 0], sizes = [1, 64], strides = [1, 1]} : vector<8x128xf32> to vector<1x64xf32>
    %177 = vector.extract_strided_slice %173 {offsets = [3, 0], sizes = [1, 32], strides = [1, 1]} : vector<8x128xf32> to vector<1x32xf32>
    %178 = vector.extract_strided_slice %173 {offsets = [4, 0], sizes = [1, 32], strides = [1, 1]} : vector<8x128xf32> to vector<1x32xf32>
    %179 = vector.extract_strided_slice %173 {offsets = [5, 0], sizes = [1, 32], strides = [1, 1]} : vector<8x128xf32> to vector<1x32xf32>
    %180 = vector.extract_strided_slice %173 {offsets = [6, 0], sizes = [1, 32], strides = [1, 1]} : vector<8x128xf32> to vector<1x32xf32>
    %181 = vector.extract_strided_slice %173 {offsets = [7, 0], sizes = [1, 32], strides = [1, 1]} : vector<8x128xf32> to vector<1x32xf32>
    %cst_57 = arith.constant dense<0.000000e+00> : vector<16x96xf32>
    %182 = tpu.matmul %164, %167, %cst_57 {dimension_numbers = #tpu.dot_dimension_numbers<[1], [0], [0], [1], [0, 0, 1, 1], [], []>} : vector<16x32xf32>, vector<32x96xf32>, vector<16x96xf32> -> vector<16x96xf32>
    %183 = vector.broadcast %174 : vector<1x96xf32> to vector<16x96xf32>
    %184 = arith.addf %182, %183 : vector<16x96xf32>
    %185 = vector.extract_strided_slice %184 {offsets = [0, 0], sizes = [16, 32], strides = [1, 1]} : vector<16x96xf32> to vector<16x32xf32>
    %186 = vector.shape_cast %185 : vector<16x32xf32> to vector<2x8x32xf32>
    %187 = vector.extract_strided_slice %184 {offsets = [0, 32], sizes = [16, 32], strides = [1, 1]} : vector<16x96xf32> to vector<16x32xf32>
    %188 = vector.shape_cast %187 : vector<16x32xf32> to vector<2x8x32xf32>
    %189 = vector.extract_strided_slice %184 {offsets = [0, 64], sizes = [16, 32], strides = [1, 1]} : vector<16x96xf32> to vector<16x32xf32>
    %190 = vector.shape_cast %189 : vector<16x32xf32> to vector<2x8x32xf32>
    %191 = vector.extract_strided_slice %186 {offsets = [0, 0, 0], sizes = [2, 8, 16], strides = [1, 1, 1]} : vector<2x8x32xf32> to vector<2x8x16xf32>
    %192 = vector.extract_strided_slice %188 {offsets = [0, 0, 0], sizes = [2, 8, 16], strides = [1, 1, 1]} : vector<2x8x32xf32> to vector<2x8x16xf32>
    %193 = vector.extract_strided_slice %190 {offsets = [0, 0, 0], sizes = [2, 8, 16], strides = [1, 1, 1]} : vector<2x8x32xf32> to vector<2x8x16xf32>
    "tpu.trace_start"() <{level = 10 : i32, message = "bqd,bkd->bqk"}> : () -> ()
    %cst_58 = arith.constant dense<0.000000e+00> : vector<2x8x8xf32>
    %194 = tpu.matmul %191, %192, %cst_58 {dimension_numbers = #tpu.dot_dimension_numbers<[2], [2], [1], [1], [0, 0, 0, 1, 1, 1], [0], [0]>} : vector<2x8x16xf32>, vector<2x8x16xf32>, vector<2x8x8xf32> -> vector<2x8x8xf32>
    "tpu.trace_stop"() : () -> ()
    %cst_59 = arith.constant 2.500000e-01 : f32
    %195 = vector.broadcast %cst_59 : f32 to vector<2x8x8xf32>
    %196 = arith.mulf %194, %195 : vector<2x8x8xf32>
    %197 = vector.shape_cast %0 : vector<2x8xf32> to vector<2x1x8xf32>
    %198 = vector.broadcast %197 : vector<2x1x8xf32> to vector<2x8x8xf32>
    %199 = arith.addf %196, %198 : vector<2x8x8xf32>
    %cst_60 = arith.constant dense<0xFF800000> : vector<2x8xf32>
    %200 = vector.multi_reduction <maximumf>, %199, %cst_60 [2] : vector<2x8x8xf32> to vector<2x8xf32>
    %201 = vector.shape_cast %200 : vector<2x8xf32> to vector<2x8x1xf32>
    %202 = vector.broadcast %201 : vector<2x8x1xf32> to vector<2x8x8xf32>
    %203 = arith.subf %199, %202 : vector<2x8x8xf32>
    %204 = math.exp %203 : vector<2x8x8xf32>
    %cst_61 = arith.constant dense<0.000000e+00> : vector<2x8xf32>
    %205 = vector.multi_reduction <add>, %204, %cst_61 [2] : vector<2x8x8xf32> to vector<2x8xf32>
    %206 = vector.shape_cast %205 : vector<2x8xf32> to vector<2x8x1xf32>
    %207 = tpu.reciprocal %206 {approx = true} : vector<2x8x1xf32> -> vector<2x8x1xf32>
    %208 = vector.broadcast %207 : vector<2x8x1xf32> to vector<2x8x8xf32>
    %209 = arith.mulf %204, %208 : vector<2x8x8xf32>
    "tpu.trace_start"() <{level = 10 : i32, message = "bqk,bkd->bqd"}> : () -> ()
    %cst_62 = arith.constant dense<0.000000e+00> : vector<2x8x16xf32>
    %210 = tpu.matmul %209, %193, %cst_62 {dimension_numbers = #tpu.dot_dimension_numbers<[2], [1], [1], [2], [0, 0, 0, 1, 1, 2], [0], [0]>} : vector<2x8x8xf32>, vector<2x8x16xf32>, vector<2x8x16xf32> -> vector<2x8x16xf32>
    "tpu.trace_stop"() : () -> ()
    %211 = vector.extract_strided_slice %186 {offsets = [0, 0, 16], sizes = [2, 8, 16], strides = [1, 1, 1]} : vector<2x8x32xf32> to vector<2x8x16xf32>
    %212 = vector.extract_strided_slice %188 {offsets = [0, 0, 16], sizes = [2, 8, 16], strides = [1, 1, 1]} : vector<2x8x32xf32> to vector<2x8x16xf32>
    %213 = vector.extract_strided_slice %190 {offsets = [0, 0, 16], sizes = [2, 8, 16], strides = [1, 1, 1]} : vector<2x8x32xf32> to vector<2x8x16xf32>
    "tpu.trace_start"() <{level = 10 : i32, message = "bqd,bkd->bqk"}> : () -> ()
    %cst_63 = arith.constant dense<0.000000e+00> : vector<2x8x8xf32>
    %214 = tpu.matmul %211, %212, %cst_63 {dimension_numbers = #tpu.dot_dimension_numbers<[2], [2], [1], [1], [0, 0, 0, 1, 1, 1], [0], [0]>} : vector<2x8x16xf32>, vector<2x8x16xf32>, vector<2x8x8xf32> -> vector<2x8x8xf32>
    "tpu.trace_stop"() : () -> ()
    %cst_64 = arith.constant 2.500000e-01 : f32
    %215 = vector.broadcast %cst_64 : f32 to vector<2x8x8xf32>
    %216 = arith.mulf %214, %215 : vector<2x8x8xf32>
    %217 = vector.shape_cast %0 : vector<2x8xf32> to vector<2x1x8xf32>
    %218 = vector.broadcast %217 : vector<2x1x8xf32> to vector<2x8x8xf32>
    %219 = arith.addf %216, %218 : vector<2x8x8xf32>
    %cst_65 = arith.constant dense<0xFF800000> : vector<2x8xf32>
    %220 = vector.multi_reduction <maximumf>, %219, %cst_65 [2] : vector<2x8x8xf32> to vector<2x8xf32>
    %221 = vector.shape_cast %220 : vector<2x8xf32> to vector<2x8x1xf32>
    %222 = vector.broadcast %221 : vector<2x8x1xf32> to vector<2x8x8xf32>
    %223 = arith.subf %219, %222 : vector<2x8x8xf32>
    %224 = math.exp %223 : vector<2x8x8xf32>
    %cst_66 = arith.constant dense<0.000000e+00> : vector<2x8xf32>
    %225 = vector.multi_reduction <add>, %224, %cst_66 [2] : vector<2x8x8xf32> to vector<2x8xf32>
    %226 = vector.shape_cast %225 : vector<2x8xf32> to vector<2x8x1xf32>
    %227 = tpu.reciprocal %226 {approx = true} : vector<2x8x1xf32> -> vector<2x8x1xf32>
    %228 = vector.broadcast %227 : vector<2x8x1xf32> to vector<2x8x8xf32>
    %229 = arith.mulf %224, %228 : vector<2x8x8xf32>
    "tpu.trace_start"() <{level = 10 : i32, message = "bqk,bkd->bqd"}> : () -> ()
    %cst_67 = arith.constant dense<0.000000e+00> : vector<2x8x16xf32>
    %230 = tpu.matmul %229, %213, %cst_67 {dimension_numbers = #tpu.dot_dimension_numbers<[2], [1], [1], [2], [0, 0, 0, 1, 1, 2], [0], [0]>} : vector<2x8x8xf32>, vector<2x8x16xf32>, vector<2x8x16xf32> -> vector<2x8x16xf32>
    "tpu.trace_stop"() : () -> ()
    %231 = tpu.concatenate %210, %230 in 2 : vector<2x8x16xf32>, vector<2x8x16xf32> -> vector<2x8x32xf32>
    %232 = vector.shape_cast %231 : vector<2x8x32xf32> to vector<16x32xf32>
    %cst_68 = arith.constant dense<0.000000e+00> : vector<16x32xf32>
    %233 = tpu.matmul %232, %168, %cst_68 {dimension_numbers = #tpu.dot_dimension_numbers<[1], [0], [0], [1], [0, 0, 1, 1], [], []>} : vector<16x32xf32>, vector<32x32xf32>, vector<16x32xf32> -> vector<16x32xf32>
    %234 = vector.broadcast %175 : vector<1x32xf32> to vector<16x32xf32>
    %235 = arith.addf %233, %234 : vector<16x32xf32>
    %236 = arith.addf %164, %235 : vector<16x32xf32>
    %cst_69 = arith.constant dense<0.000000e+00> : vector<16xf32>
    %237 = vector.multi_reduction <add>, %236, %cst_69 [1] : vector<16x32xf32> to vector<16xf32>
    %238 = vector.shape_cast %237 : vector<16xf32> to vector<16x1xf32>
    %cst_70 = arith.constant 3.200000e+01 : f32
    %239 = vector.broadcast %cst_70 : f32 to vector<16x1xf32>
    %240 = arith.divf %238, %239 : vector<16x1xf32>
    %241 = vector.broadcast %240 : vector<16x1xf32> to vector<16x32xf32>
    %242 = arith.subf %236, %241 : vector<16x32xf32>
    %243 = arith.mulf %242, %242 : vector<16x32xf32>
    %cst_71 = arith.constant dense<0.000000e+00> : vector<16xf32>
    %244 = vector.multi_reduction <add>, %243, %cst_71 [1] : vector<16x32xf32> to vector<16xf32>
    %245 = vector.shape_cast %244 : vector<16xf32> to vector<16x1xf32>
    %cst_72 = arith.constant 3.200000e+01 : f32
    %246 = vector.broadcast %cst_72 : f32 to vector<16x1xf32>
    %247 = arith.divf %245, %246 : vector<16x1xf32>
    %248 = vector.broadcast %240 : vector<16x1xf32> to vector<16x32xf32>
    %249 = arith.subf %236, %248 : vector<16x32xf32>
    %cst_73 = arith.constant 9.99999996E-13 : f32
    %250 = vector.broadcast %cst_73 : f32 to vector<16x1xf32>
    %251 = arith.addf %247, %250 : vector<16x1xf32>
    %252 = math.rsqrt %251 : vector<16x1xf32>
    %253 = vector.broadcast %252 : vector<16x1xf32> to vector<16x32xf32>
    %254 = arith.mulf %249, %253 : vector<16x32xf32>
    %255 = vector.broadcast %178 : vector<1x32xf32> to vector<16x32xf32>
    %256 = arith.mulf %254, %255 : vector<16x32xf32>
    %257 = vector.broadcast %179 : vector<1x32xf32> to vector<16x32xf32>
    %258 = arith.addf %256, %257 : vector<16x32xf32>
    %cst_74 = arith.constant dense<0.000000e+00> : vector<16x64xf32>
    %259 = tpu.matmul %258, %169, %cst_74 {dimension_numbers = #tpu.dot_dimension_numbers<[1], [0], [0], [1], [0, 0, 1, 1], [], []>} : vector<16x32xf32>, vector<32x64xf32>, vector<16x64xf32> -> vector<16x64xf32>
    %260 = vector.broadcast %176 : vector<1x64xf32> to vector<16x64xf32>
    %261 = arith.addf %259, %260 : vector<16x64xf32>
    %cst_75 = arith.constant 5.000000e-01 : f32
    %262 = vector.broadcast %cst_75 : f32 to vector<16x64xf32>
    %263 = arith.mulf %262, %261 : vector<16x64xf32>
    %cst_76 = arith.constant 4.471500e-02 : f32
    %264 = vector.broadcast %cst_76 : f32 to vector<16x64xf32>
    %265 = arith.mulf %264, %261 : vector<16x64xf32>
    %266 = arith.mulf %265, %261 : vector<16x64xf32>
    %267 = arith.mulf %266, %261 : vector<16x64xf32>
    %268 = arith.addf %261, %267 : vector<16x64xf32>
    %cst_77 = arith.constant 0.797884583 : f32
    %269 = vector.broadcast %cst_77 : f32 to vector<16x64xf32>
    %270 = arith.mulf %269, %268 : vector<16x64xf32>
    %271 = math.tanh %270 : vector<16x64xf32>
    %cst_78 = arith.constant 1.000000e+00 : f32
    %272 = vector.broadcast %cst_78 : f32 to vector<16x64xf32>
    %273 = arith.addf %272, %271 : vector<16x64xf32>
    %274 = arith.mulf %263, %273 : vector<16x64xf32>
    %cst_79 = arith.constant dense<0.000000e+00> : vector<16x32xf32>
    %275 = tpu.matmul %274, %171, %cst_79 {dimension_numbers = #tpu.dot_dimension_numbers<[1], [0], [0], [1], [0, 0, 1, 1], [], []>} : vector<16x64xf32>, vector<64x32xf32>, vector<16x32xf32> -> vector<16x32xf32>
    %276 = vector.broadcast %177 : vector<1x32xf32> to vector<16x32xf32>
    %277 = arith.addf %275, %276 : vector<16x32xf32>
    %278 = arith.addf %258, %277 : vector<16x32xf32>
    %cst_80 = arith.constant dense<0.000000e+00> : vector<16xf32>
    %279 = vector.multi_reduction <add>, %278, %cst_80 [1] : vector<16x32xf32> to vector<16xf32>
    %280 = vector.shape_cast %279 : vector<16xf32> to vector<16x1xf32>
    %cst_81 = arith.constant 3.200000e+01 : f32
    %281 = vector.broadcast %cst_81 : f32 to vector<16x1xf32>
    %282 = arith.divf %280, %281 : vector<16x1xf32>
    %283 = vector.broadcast %282 : vector<16x1xf32> to vector<16x32xf32>
    %284 = arith.subf %278, %283 : vector<16x32xf32>
    %285 = arith.mulf %284, %284 : vector<16x32xf32>
    %cst_82 = arith.constant dense<0.000000e+00> : vector<16xf32>
    %286 = vector.multi_reduction <add>, %285, %cst_82 [1] : vector<16x32xf32> to vector<16xf32>
    %287 = vector.shape_cast %286 : vector<16xf32> to vector<16x1xf32>
    %cst_83 = arith.constant 3.200000e+01 : f32
    %288 = vector.broadcast %cst_83 : f32 to vector<16x1xf32>
    %289 = arith.divf %287, %288 : vector<16x1xf32>
    %290 = vector.broadcast %282 : vector<16x1xf32> to vector<16x32xf32>
    %291 = arith.subf %278, %290 : vector<16x32xf32>
    %cst_84 = arith.constant 9.99999996E-13 : f32
    %292 = vector.broadcast %cst_84 : f32 to vector<16x1xf32>
    %293 = arith.addf %289, %292 : vector<16x1xf32>
    %294 = math.rsqrt %293 : vector<16x1xf32>
    %295 = vector.broadcast %294 : vector<16x1xf32> to vector<16x32xf32>
    %296 = arith.mulf %291, %295 : vector<16x32xf32>
    %297 = vector.broadcast %180 : vector<1x32xf32> to vector<16x32xf32>
    %298 = arith.mulf %296, %297 : vector<16x32xf32>
    %299 = vector.broadcast %181 : vector<1x32xf32> to vector<16x32xf32>
    %300 = arith.addf %298, %299 : vector<16x32xf32>
    %301 = vector.shape_cast %300 : vector<16x32xf32> to vector<2x8x32xf32>
    %c0_85 = arith.constant 0 : index
    %c0_86 = arith.constant 0 : index
    %c0_87 = arith.constant 0 : index
    %302 = vector.load %arg7[%c0_85, %c0_86, %c0_87] : memref<2x8x32xf32, #tpu.memory_space<vmem>>, vector<2x8x32xf32>
    tpu.vector_store %arg7[%c0_85, %c0_86, %c0_87], %301 {strides = array<i32>} : memref<2x8x32xf32, #tpu.memory_space<vmem>>, vector<2x8x32xf32>,
    return
  }
  func.func @transform_0(%arg0: i32) -> (i32, i32, i32) {
    %c0_i32 = arith.constant 0 : i32
    %c0_i32_0 = arith.constant 0 : i32
    %c0_i32_1 = arith.constant 0 : i32
    %c0_i32_2 = arith.constant 0 : i32
    return %c0_i32, %c0_i32_0, %c0_i32_1 : i32, i32, i32
  }
  func.func @transform_1(%arg0: i32) -> (i32, i32) {
    %c0_i32 = arith.constant 0 : i32
    %c0_i32_0 = arith.constant 0 : i32
    %c0_i32_1 = arith.constant 0 : i32
    return %c0_i32, %c0_i32_0 : i32, i32
  }
  func.func @transform_2(%arg0: i32) -> (i32, i32) {
    %c0_i32 = arith.constant 0 : i32
    %c0_i32_0 = arith.constant 0 : i32
    %c0_i32_1 = arith.constant 0 : i32
    return %c0_i32, %c0_i32_0 : i32, i32
  }
  func.func @transform_3(%arg0: i32) -> (i32, i32, i32) {
    %c0_i32 = arith.constant 0 : i32
    %c0_i32_0 = arith.constant 0 : i32
    %c0_i32_1 = arith.constant 0 : i32
    %c0_i32_2 = arith.constant 0 : i32
    return %c0_i32, %c0_i32_0, %c0_i32_1 : i32, i32, i32
  }
  func.func @transform_4(%arg0: i32) -> (i32, i32, i32) {
    %c0_i32 = arith.constant 0 : i32
    %c0_i32_0 = arith.constant 0 : i32
    %c0_i32_1 = arith.constant 0 : i32
    %c0_i32_2 = arith.constant 0 : i32
    return %c0_i32, %c0_i32_0, %c0_i32_1 : i32, i32, i32
  }
  func.func @transform_5(%arg0: i32) -> (i32, i32, i32) {
    %c0_i32 = arith.constant 0 : i32
    %c0_i32_0 = arith.constant 0 : i32
    %c0_i32_1 = arith.constant 0 : i32
    %c0_i32_2 = arith.constant 0 : i32
    return %c0_i32, %c0_i32_0, %c0_i32_1 : i32, i32, i32
  }
  func.func @transform_6(%arg0: i32) -> (i32, i32, i32) {
    %c0_i32 = arith.constant 0 : i32
    %c0_i32_0 = arith.constant 0 : i32
    %c0_i32_1 = arith.constant 0 : i32
    %c0_i32_2 = arith.constant 0 : i32
    return %c0_i32, %c0_i32_0, %c0_i32_1 : i32, i32, i32
  }
}

</mosaic_0001>

<llo_original>
// kernel: question_encoder.1
$region0: #{question_encoder.1}
  #allocation0 [shape = 'u32[]', space=smem, size = 0x4, offset = 0x4, fixed_abs, tag = 'smem constant byte address 0x4 - core index']
  #allocation1 [shape = 'u32[144,128]{1,0:T(1,128)}', space=vmem, size = 0x12000, scoped, tag = 'internal scratch']
  %s0 = inlined_call_operand.vmem [shape: f32[2,8,32], index: 0, kind: input, shape index: {}]
  %s1 = inlined_call_operand.vmem [shape: f32[2,8], index: 1, kind: input, shape index: {}]
  %s2 = inlined_call_operand.vmem [shape: f32[2,32], index: 2, kind: input, shape index: {}]
  %s3 = inlined_call_operand.vmem [shape: f32[2,32,192], index: 3, kind: input, shape index: {}]
  %s4 = inlined_call_operand.vmem [shape: f32[2,64,32], index: 4, kind: input, shape index: {}]
  %s5 = inlined_call_operand.vmem [shape: f32[2,8,128], index: 5, kind: input, shape index: {}]
  %s6 = inlined_call_operand.hbm [shape: f32[2,8,32], index: 6, kind: output, shape index: {}]
  %s7 = sld [smem:[#allocation0]]
  $region34: #{question_encoder.1} parent=0
    _
  %s9 = ssub.s32 1, %s7
  %s10 = scalar_select 0, %s9, %s7
  $region1: #{question_encoder.1} parent=0
    #allocation2 [shape = 'u8[8192]{0}', space=vmem, size = 0x2000, scoped, tag = 'output window, operand 0, single buffered']
    #allocation3 [shape = 's32[1]{0}', space=sflag, size = 0x4, scoped, tag = 'scoped memory for question_encoder.1']
    %11 = vsyncpa [#allocation3], 0
    // Predicated region
    $region2: #{question_encoder.1} parent=1 // pred_check
      _
    $region3: #{question_encoder.1} parent=1 // pred_check_branch
      %13 = sbr.rel (0) target = $region5
    $region4: #{question_encoder.1} parent=1 // pred_region
      _
    $region5: #{question_encoder.1} parent=1 // pred_fallthru
      _
    // Predicated region
    $region6: #{question_encoder.1} parent=1 // pred_check
      _
    $region7: #{question_encoder.1} parent=1 // pred_check_branch
      %15 = sbr.rel (0) target = $region9
    $region8: #{question_encoder.1} parent=1 // pred_region
      _
    $region9: #{question_encoder.1} parent=1 // pred_fallthru
      _
    // Predicated region
    $region10: #{question_encoder.1} parent=1 // pred_check
      _
    $region11: #{question_encoder.1} parent=1 // pred_check_branch
      %17 = sbr.rel (0) target = $region13
    $region12: #{question_encoder.1} parent=1 // pred_region
      _
    $region13: #{question_encoder.1} parent=1 // pred_fallthru
      _
    // Predicated region
    $region14: #{question_encoder.1} parent=1 // pred_check
      _
    $region15: #{question_encoder.1} parent=1 // pred_check_branch
      %19 = sbr.rel (0) target = $region17
    $region16: #{question_encoder.1} parent=1 // pred_region
      _
    $region17: #{question_encoder.1} parent=1 // pred_fallthru
      _
    // Predicated region
    $region18: #{question_encoder.1} parent=1 // pred_check
      _
    $region19: #{question_encoder.1} parent=1 // pred_check_branch
      %21 = sbr.rel (0) target = $region21
    $region20: #{question_encoder.1} parent=1 // pred_region
      _
    $region21: #{question_encoder.1} parent=1 // pred_fallthru
      _
    // Predicated region
    $region22: #{question_encoder.1} parent=1 // pred_check
      _
    $region23: #{question_encoder.1} parent=1 // pred_check_branch
      %23 = sbr.rel (0) target = $region25
    $region24: #{question_encoder.1} parent=1 // pred_region
      _
    $region25: #{question_encoder.1} parent=1 // pred_fallthru
      _
    %v24 = vld [vmem:[%s1] sm:$0x3]
    %v25 = vld [vmem:[%s0] sm:$0xff]
    %v26 = vld [vmem:[%s0 + $0x8] sm:$0xff]
    %v27 = vld [vmem:[%s2] sm:$0x1]
    %v28 = vld [vmem:[%s2 + $0x1] sm:$0x1]
    %vm29 = vcmask 261120
    %v30 = vsel %vm29, %v25, 0.0
    %31 = vadd.xlane.f32.xlu0 %v30
    %v32 = vpop.xlane.xlu0 %31
    %v33 = vsel %vm29, %v26, 0.0
    %34 = vadd.xlane.f32.xlu0 %v33
    %v35 = vpop.xlane.xlu0 %34
    %v36 = vrcp.pop 32.0
    %v37 = vmul.f32 %v32, %v36
    %v38 = vmul.f32 %v35, %v36
    %v39 = vsub.f32 %v25, %v37
    %v40 = vsub.f32 %v26, %v38
    %v41 = vmul.f32 %v39, %v39
    %v42 = vmul.f32 %v40, %v40
    %v43 = vsel %vm29, %v41, 0.0
    %44 = vadd.xlane.f32.xlu0 %v43
    %v45 = vpop.xlane.xlu0 %44
    %v46 = vsel %vm29, %v42, 0.0
    %47 = vadd.xlane.f32.xlu0 %v46
    %v48 = vpop.xlane.xlu0 %47
    %v49 = vmul.f32 %v45, %v36
    %v50 = vmul.f32 %v48, %v36
    %v51 = vadd.f32 %v49, 1e-12
    %v52 = vadd.f32 %v50, 1e-12
    %v53 = vrsqrt.pop %v51
    %v54 = vrsqrt.pop %v52
    %v55 = vmul.f32 %v39, %v53
    %v56 = vmul.f32 %v40, %v54
    %v57 = vlaneseq
    %v58 = vshrl.u32 %v57, 7
    %v59 = vsub.s32 0, %v58
    %v60 = vrot.slane %v27, %v59
    %v61 = vmul.f32 %v55, %v60
    %v62 = vmul.f32 %v56, %v60
    %v63 = vlaneseq
    %v64 = vshrl.u32 %v63, 7
    %v65 = vsub.s32 0, %v64
    %v66 = vrot.slane %v28, %v65
    %v67 = vadd.f32 %v61, %v66
    %v68 = vadd.f32 %v62, %v66
    %v69 = vld [vmem:[%s3] sm:$0xff]
    %v70 = vld [vmem:[%s3 + $0x8] sm:$0xff]
    %v71 = vld [vmem:[%s3 + $0x10] sm:$0xff]
    %v72 = vld [vmem:[%s3 + $0x18] sm:$0xff]
    %v73 = vld [vmem:[%s3 + $0x20] sm:$0xff]
    %v74 = vld [vmem:[%s3 + $0x28] sm:$0xff]
    %v75 = vld [vmem:[%s3 + $0x30] sm:$0xff]
    %v76 = vld [vmem:[%s3 + $0x38] sm:$0xff]
    %v77 = vld [vmem:[%s4] sm:$0xff]
    %v78 = vld [vmem:[%s4 + $0x8] sm:$0xff]
    %v79 = vld [vmem:[%s4 + $0x10] sm:$0xff]
    %v80 = vld [vmem:[%s4 + $0x18] sm:$0xff]
    %v81 = vld [vmem:[%s4 + $0x20] sm:$0xff]
    %v82 = vld [vmem:[%s4 + $0x28] sm:$0xff]
    %v83 = vld [vmem:[%s4 + $0x30] sm:$0xff]
    %v84 = vld [vmem:[%s4 + $0x38] sm:$0xff]
    %v85 = vld [vmem:[%s5] sm:$0xff]
    %v86 = vlaneseq
    %v87 = vshrl.u32 %v86, 7
    %v88 = vsub.s32 0, %v87
    %v89 = vrot.slane %v85, %v88
    %v91 = vsel %vm29, %v67, 0
    %v94 = vsel %vm29, %v68, 0
    %96 = vmatprep.subr.mxu0 0.0
    %97 = vmatpush1.msra.mxu0 0.0
    %98 = vmatprep.subr.mxu0 0.0
    %99 = vmatpush1.msra.mxu0 0.0
    %100 = vmatprep.subr.mxu0 0.0
    %101 = vmatpush1.msra.mxu0 0.0
    %102 = vmatprep.subr.mxu0 0.0
    %103 = vmatpush1.msra.mxu0 0.0
    %104 = vmatprep.subr.mxu0 0.0
    %105 = vmatpush1.msra.mxu0 0.0
    %106 = vmatprep.subr.mxu0 0.0
    %107 = vmatpush1.msra.mxu0 0.0
    %108 = vmatprep.subr.mxu0 0.0
    %109 = vmatpush1.msra.mxu0 0.0
    %110 = vmatprep.subr.mxu0 0.0
    %111 = vmatpush1.msra.mxu0 0.0
    %112 = vmatprep.subr.mxu0 0.0
    %113 = vmatpush1.msra.mxu0 0.0
    %114 = vmatprep.subr.mxu0 0.0
    %115 = vmatpush1.msra.mxu0 0.0
    %116 = vmatprep.subr.mxu0 0.0
    %117 = vmatpush1.msra.mxu0 0.0
    %118 = vmatprep.subr.mxu0 0.0
    %119 = vmatpush1.msra.mxu0 0.0
    %120 = vmatprep.subr.mxu0 0.0
    %121 = vmatpush1.msra.mxu0 %v75
    %122 = vmatprep.subr.mxu0 0.0
    %123 = vmatpush1.msra.mxu0 %v73
    %124 = vmatprep.subr.mxu0 0.0
    %125 = vmatpush1.msra.mxu0 %v71
    %126 = vmatprep.subr.mxu0 0.0
    %127 = vmatpush1.msra.mxu0 %v69
    %128 = vmatprep.subr.mxu0 0.0
    %129 = vmatpush2.msra.mxu0 0.0
    %130 = vmatprep.subr.mxu0 0.0
    %131 = vmatpush2.msra.mxu0 0.0
    %132 = vmatprep.subr.mxu0 0.0
    %133 = vmatpush2.msra.mxu0 0.0
    %134 = vmatprep.subr.mxu0 0.0
    %135 = vmatpush2.msra.mxu0 0.0
    %136 = vmatprep.subr.mxu0 0.0
    %137 = vmatpush2.msra.mxu0 0.0
    %138 = vmatprep.subr.mxu0 0.0
    %139 = vmatpush2.msra.mxu0 0.0
    %140 = vmatprep.subr.mxu0 0.0
    %141 = vmatpush2.msra.mxu0 0.0
    %142 = vmatprep.subr.mxu0 0.0
    %143 = vmatpush2.msra.mxu0 0.0
    %144 = vmatprep.subr.mxu0 0.0
    %145 = vmatpush2.msra.mxu0 0.0
    %146 = vmatprep.subr.mxu0 0.0
    %147 = vmatpush2.msra.mxu0 0.0
    %148 = vmatprep.subr.mxu0 0.0
    %149 = vmatpush2.msra.mxu0 0.0
    %150 = vmatprep.subr.mxu0 0.0
    %151 = vmatpush2.msra.mxu0 0.0
    %152 = vmatprep.subr.mxu0 0.0
    %153 = vmatpush2.msra.mxu0 0.0
    %154 = vmatprep.subr.mxu0 0.0
    %155 = vmatpush2.msra.mxu0 0.0
    %156 = vmatprep.subr.mxu0 0.0
    %157 = vmatpush2.msra.mxu0 0.0
    %158 = vmatprep.subr.mxu0 0.0
    %159 = vmatpush2.msra.mxu0 0.0
    %160 = vmatprep.mubr.f32.mxu0 0.0
    %161 = vmatmul.mubr.f32.gmra.mxu0 %v91
    %v162 = vpop.f32.mrf.mxu0
    %v163 = vadd.f32 %v89, %v162
    %v164 = vpop.f32.mrf.mxu0
    %165 = vmatprep.mubr.f32.mxu0 0.0
    %166 = vmatmul.mubr.f32.gmra.mxu0 %v94
    %v167 = vpop.f32.mrf.mxu0
    %v168 = vadd.f32 %v89, %v167
    %v169 = vpop.f32.mrf.mxu0
    %170 = vdwg.mxu0
    %172 = vrot.lane.b32.xlu0 %v163, 96
    %v173 = vpop.permute.xlu0 %172
    %vm174 = vcmask 130048
    %v175 = vsel %vm174, %v163, 0
    %v177 = vsel %vm174, %v173, 0
    %179 = vmatprep.subr.mxu0 0.0
    %180 = vmatpush1.xpose.msra.mxu0 0.0
    %181 = vmatprep.subr.mxu0 0.0
    %182 = vmatpush1.xpose.msra.mxu0 0.0
    %183 = vmatprep.subr.mxu0 0.0
    %184 = vmatpush1.xpose.msra.mxu0 0.0
    %185 = vmatprep.subr.mxu0 0.0
    %186 = vmatpush1.xpose.msra.mxu0 0.0
    %187 = vmatprep.subr.mxu0 0.0
    %188 = vmatpush1.xpose.msra.mxu0 0.0
    %189 = vmatprep.subr.mxu0 0.0
    %190 = vmatpush1.xpose.msra.mxu0 0.0
    %191 = vmatprep.subr.mxu0 0.0
    %192 = vmatpush1.xpose.msra.mxu0 0.0
    %193 = vmatprep.subr.mxu0 0.0
    %194 = vmatpush1.xpose.msra.mxu0 0.0
    %195 = vmatprep.subr.mxu0 0.0
    %196 = vmatpush1.xpose.msra.mxu0 0.0
    %197 = vmatprep.subr.mxu0 0.0
    %198 = vmatpush1.xpose.msra.mxu0 0.0
    %199 = vmatprep.subr.mxu0 0.0
    %200 = vmatpush1.xpose.msra.mxu0 0.0
    %201 = vmatprep.subr.mxu0 0.0
    %202 = vmatpush1.xpose.msra.mxu0 0.0
    %203 = vmatprep.subr.mxu0 0.0
    %204 = vmatpush1.xpose.msra.mxu0 0.0
    %205 = vmatprep.subr.mxu0 0.0
    %206 = vmatpush1.xpose.msra.mxu0 0.0
    %207 = vmatprep.subr.mxu0 0.0
    %208 = vmatpush1.xpose.msra.mxu0 0.0
    %209 = vmatprep.subr.mxu0 0.0
    %210 = vmatpush1.xpose.msra.mxu0 %v177
    %211 = vmatprep.subr.mxu0 0.0
    %212 = vmatpush2.xpose.msra.mxu0 0.0
    %213 = vmatprep.subr.mxu0 0.0
    %214 = vmatpush2.xpose.msra.mxu0 0.0
    %215 = vmatprep.subr.mxu0 0.0
    %216 = vmatpush2.xpose.msra.mxu0 0.0
    %217 = vmatprep.subr.mxu0 0.0
    %218 = vmatpush2.xpose.msra.mxu0 0.0
    %219 = vmatprep.subr.mxu0 0.0
    %220 = vmatpush2.xpose.msra.mxu0 0.0
    %221 = vmatprep.subr.mxu0 0.0
    %222 = vmatpush2.xpose.msra.mxu0 0.0
    %223 = vmatprep.subr.mxu0 0.0
    %224 = vmatpush2.xpose.msra.mxu0 0.0
    %225 = vmatprep.subr.mxu0 0.0
    %226 = vmatpush2.xpose.msra.mxu0 0.0
    %227 = vmatprep.subr.mxu0 0.0
    %228 = vmatpush2.xpose.msra.mxu0 0.0
    %229 = vmatprep.subr.mxu0 0.0
    %230 = vmatpush2.xpose.msra.mxu0 0.0
    %231 = vmatprep.subr.mxu0 0.0
    %232 = vmatpush2.xpose.msra.mxu0 0.0
    %233 = vmatprep.subr.mxu0 0.0
    %234 = vmatpush2.xpose.msra.mxu0 0.0
    %235 = vmatprep.subr.mxu0 0.0
    %236 = vmatpush2.xpose.msra.mxu0 0.0
    %237 = vmatprep.subr.mxu0 0.0
    %238 = vmatpush2.xpose.msra.mxu0 0.0
    %239 = vmatprep.subr.mxu0 0.0
    %240 = vmatpush2.xpose.msra.mxu0 0.0
    %241 = vmatprep.subr.mxu0 0.0
    %242 = vmatpush2.xpose.msra.mxu0 0.0
    %243 = vmatprep.mubr.f32.mxu0 0.0
    %244 = vmatmul.mubr.f32.gmra.mxu0 %v175
    %v245 = vpop.f32.mrf.mxu0
    %v246 = vadd.f32 0.0, %v245
    %v247 = vpop.f32.mrf.mxu0
    %248 = vdwg.mxu0
    %250 = vrot.lane.b32.xlu0 %v168, 96
    %v251 = vpop.permute.xlu0 %250
    %v252 = vsel %vm174, %v168, 0
    %v254 = vsel %vm174, %v251, 0
    %256 = vmatprep.subr.mxu0 0.0
    %257 = vmatpush1.xpose.msra.mxu0 0.0
    %258 = vmatprep.subr.mxu0 0.0
    %259 = vmatpush1.xpose.msra.mxu0 0.0
    %260 = vmatprep.subr.mxu0 0.0
    %261 = vmatpush1.xpose.msra.mxu0 0.0
    %262 = vmatprep.subr.mxu0 0.0
    %263 = vmatpush1.xpose.msra.mxu0 0.0
    %264 = vmatprep.subr.mxu0 0.0
    %265 = vmatpush1.xpose.msra.mxu0 0.0
    %266 = vmatprep.subr.mxu0 0.0
    %267 = vmatpush1.xpose.msra.mxu0 0.0
    %268 = vmatprep.subr.mxu0 0.0
    %269 = vmatpush1.xpose.msra.mxu0 0.0
    %270 = vmatprep.subr.mxu0 0.0
    %271 = vmatpush1.xpose.msra.mxu0 0.0
    %272 = vmatprep.subr.mxu0 0.0
    %273 = vmatpush1.xpose.msra.mxu0 0.0
    %274 = vmatprep.subr.mxu0 0.0
    %275 = vmatpush1.xpose.msra.mxu0 0.0
    %276 = vmatprep.subr.mxu0 0.0
    %277 = vmatpush1.xpose.msra.mxu0 0.0
    %278 = vmatprep.subr.mxu0 0.0
    %279 = vmatpush1.xpose.msra.mxu0 0.0
    %280 = vmatprep.subr.mxu0 0.0
    %281 = vmatpush1.xpose.msra.mxu0 0.0
    %282 = vmatprep.subr.mxu0 0.0
    %283 = vmatpush1.xpose.msra.mxu0 0.0
    %284 = vmatprep.subr.mxu0 0.0
    %285 = vmatpush1.xpose.msra.mxu0 0.0
    %286 = vmatprep.subr.mxu0 0.0
    %287 = vmatpush1.xpose.msra.mxu0 %v254
    %288 = vmatprep.subr.mxu0 0.0
    %289 = vmatpush2.xpose.msra.mxu0 0.0
    %290 = vmatprep.subr.mxu0 0.0
    %291 = vmatpush2.xpose.msra.mxu0 0.0
    %292 = vmatprep.subr.mxu0 0.0
    %293 = vmatpush2.xpose.msra.mxu0 0.0
    %294 = vmatprep.subr.mxu0 0.0
    %295 = vmatpush2.xpose.msra.mxu0 0.0
    %296 = vmatprep.subr.mxu0 0.0
    %297 = vmatpush2.xpose.msra.mxu0 0.0
    %298 = vmatprep.subr.mxu0 0.0
    %299 = vmatpush2.xpose.msra.mxu0 0.0
    %300 = vmatprep.subr.mxu0 0.0
    %301 = vmatpush2.xpose.msra.mxu0 0.0
    %302 = vmatprep.subr.mxu0 0.0
    %303 = vmatpush2.xpose.msra.mxu0 0.0
    %304 = vmatprep.subr.mxu0 0.0
    %305 = vmatpush2.xpose.msra.mxu0 0.0
    %306 = vmatprep.subr.mxu0 0.0
    %307 = vmatpush2.xpose.msra.mxu0 0.0
    %308 = vmatprep.subr.mxu0 0.0
    %309 = vmatpush2.xpose.msra.mxu0 0.0
    %310 = vmatprep.subr.mxu0 0.0
    %311 = vmatpush2.xpose.msra.mxu0 0.0
    %312 = vmatprep.subr.mxu0 0.0
    %313 = vmatpush2.xpose.msra.mxu0 0.0
    %314 = vmatprep.subr.mxu0 0.0
    %315 = vmatpush2.xpose.msra.mxu0 0.0
    %316 = vmatprep.subr.mxu0 0.0
    %317 = vmatpush2.xpose.msra.mxu0 0.0
    %318 = vmatprep.subr.mxu0 0.0
    %319 = vmatpush2.xpose.msra.mxu0 0.0
    %320 = vmatprep.mubr.f32.mxu0 0.0
    %321 = vmatmul.mubr.f32.gmra.mxu0 %v252
    %v322 = vpop.f32.mrf.mxu0
    %v323 = vadd.f32 0.0, %v322
    %v324 = vpop.f32.mrf.mxu0
    %325 = vdwg.mxu0
    %v326 = vmul.f32 %v246, 0.25
    %v327 = vmul.f32 %v323, 0.25
    %v330 = vunpack.c.l.s4 1966171168
    %v331 = vunpack.c.0.s8 %v330
    %v332 = vlaneseq
    %v333 = vshrl.u32 %v332, 7
    %v334 = vsub.s32 %v331, %v333
    %v335 = vrot.slane %v24, %v334
    %v336 = vcombine.high %v335, %v335
    %v338 = vunpack.c.l.s4 1966171168
    %v339 = vunpack.c.0.s8 %v338
    %v340 = vlaneseq
    %v341 = vshrl.u32 %v340, 7
    %v342 = vsub.s32 %v339, %v341
    %v343 = vrot.slane %v335, %v342
    %v345 = vunpack.c.l.s4 1966171168
    %v346 = vunpack.c.0.s8 %v345
    %v347 = vlaneseq
    %v348 = vshrl.u32 %v347, 7
    %v349 = vsub.s32 %v346, %v348
    %v350 = vrot.slane %v336, %v349
    %v351 = vlaneseq
    %v352 = vshrl.u32 %v351, 7
    %v353 = vsub.s32 0, %v352
    %v354 = vrot.slane %v343, %v353
    %v355 = vlaneseq
    %v356 = vshrl.u32 %v355, 7
    %v357 = vsub.s32 0, %v356
    %v358 = vrot.slane %v350, %v357
    %v361 = vadd.f32 %v326, %v354
    %v362 = vadd.f32 %v327, %v358
    %vm363 = vcmask 64512
    %v364 = vsel %vm363, %v361, -inf
    %365 = vmax.xlane.f32.xlu0 %v364
    %v366 = vpop.xlane.xlu0 %365
    %v367 = vsel %vm363, %v362, -inf
    %368 = vmax.xlane.f32.xlu0 %v367
    %v369 = vpop.xlane.xlu0 %368
    %v370 = vsub.f32 %v361, %v366
    %v371 = vsub.f32 %v362, %v369
    %v372 = vmul.f32 %v370, 1.442695
    %v373 = vpow.pop %v372
    %v374 = vmul.f32 %v371, 1.442695
    %v375 = vpow.pop %v374
    %v376 = vsel %vm363, %v373, 0.0
    %377 = vadd.xlane.f32.xlu0 %v376
    %v378 = vpop.xlane.xlu0 %377
    %v379 = vsel %vm363, %v375, 0.0
    %380 = vadd.xlane.f32.xlu0 %v379
    %v381 = vpop.xlane.xlu0 %380
    %v382 = vrcp.pop %v378
    %v383 = vrcp.pop %v381
    %v384 = vmul.f32 %v373, %v382
    %v385 = vmul.f32 %v375, %v383
    %386 = vrot.lane.b32.xlu0 %v163, 64
    %v387 = vpop.permute.xlu0 %386
    %v390 = vsel %vm363, %v384, 0
    %392 = vmatprep.subr.mxu0 0.0
    %393 = vmatpush1.msra.mxu0 0.0
    %394 = vmatprep.subr.mxu0 0.0
    %395 = vmatpush1.msra.mxu0 0.0
    %396 = vmatprep.subr.mxu0 0.0
    %397 = vmatpush1.msra.mxu0 0.0
    %398 = vmatprep.subr.mxu0 0.0
    %399 = vmatpush1.msra.mxu0 0.0
    %400 = vmatprep.subr.mxu0 0.0
    %401 = vmatpush1.msra.mxu0 0.0
    %402 = vmatprep.subr.mxu0 0.0
    %403 = vmatpush1.msra.mxu0 0.0
    %404 = vmatprep.subr.mxu0 0.0
    %405 = vmatpush1.msra.mxu0 0.0
    %406 = vmatprep.subr.mxu0 0.0
    %407 = vmatpush1.msra.mxu0 0.0
    %408 = vmatprep.subr.mxu0 0.0
    %409 = vmatpush1.msra.mxu0 0.0
    %410 = vmatprep.subr.mxu0 0.0
    %411 = vmatpush1.msra.mxu0 0.0
    %412 = vmatprep.subr.mxu0 0.0
    %413 = vmatpush1.msra.mxu0 0.0
    %414 = vmatprep.subr.mxu0 0.0
    %415 = vmatpush1.msra.mxu0 0.0
    %416 = vmatprep.subr.mxu0 0.0
    %417 = vmatpush1.msra.mxu0 0.0
    %418 = vmatprep.subr.mxu0 0.0
    %419 = vmatpush1.msra.mxu0 0.0
    %420 = vmatprep.subr.mxu0 0.0
    %421 = vmatpush1.msra.mxu0 0.0
    %422 = vmatprep.subr.mxu0 0.0
    %423 = vmatpush1.msra.mxu0 %v387
    %424 = vmatprep.subr.mxu0 0.0
    %425 = vmatpush2.msra.mxu0 0.0
    %426 = vmatprep.subr.mxu0 0.0
    %427 = vmatpush2.msra.mxu0 0.0
    %428 = vmatprep.subr.mxu0 0.0
    %429 = vmatpush2.msra.mxu0 0.0
    %430 = vmatprep.subr.mxu0 0.0
    %431 = vmatpush2.msra.mxu0 0.0
    %432 = vmatprep.subr.mxu0 0.0
    %433 = vmatpush2.msra.mxu0 0.0
    %434 = vmatprep.subr.mxu0 0.0
    %435 = vmatpush2.msra.mxu0 0.0
    %436 = vmatprep.subr.mxu0 0.0
    %437 = vmatpush2.msra.mxu0 0.0
    %438 = vmatprep.subr.mxu0 0.0
    %439 = vmatpush2.msra.mxu0 0.0
    %440 = vmatprep.subr.mxu0 0.0
    %441 = vmatpush2.msra.mxu0 0.0
    %442 = vmatprep.subr.mxu0 0.0
    %443 = vmatpush2.msra.mxu0 0.0
    %444 = vmatprep.subr.mxu0 0.0
    %445 = vmatpush2.msra.mxu0 0.0
    %446 = vmatprep.subr.mxu0 0.0
    %447 = vmatpush2.msra.mxu0 0.0
    %448 = vmatprep.subr.mxu0 0.0
    %449 = vmatpush2.msra.mxu0 0.0
    %450 = vmatprep.subr.mxu0 0.0
    %451 = vmatpush2.msra.mxu0 0.0
    %452 = vmatprep.subr.mxu0 0.0
    %453 = vmatpush2.msra.mxu0 0.0
    %454 = vmatprep.subr.mxu0 0.0
    %455 = vmatpush2.msra.mxu0 0.0
    %456 = vmatprep.mubr.f32.mxu0 0.0
    %457 = vmatmul.mubr.f32.gmra.mxu0 %v390
    %v458 = vpop.f32.mrf.mxu0
    %v459 = vadd.f32 0.0, %v458
    %v460 = vpop.f32.mrf.mxu0
    %461 = vdwg.mxu0
    %462 = vrot.lane.b32.xlu0 %v168, 64
    %v463 = vpop.permute.xlu0 %462
    %v466 = vsel %vm363, %v385, 0
    %468 = vmatprep.subr.mxu0 0.0
    %469 = vmatpush1.msra.mxu0 0.0
    %470 = vmatprep.subr.mxu0 0.0
    %471 = vmatpush1.msra.mxu0 0.0
    %472 = vmatprep.subr.mxu0 0.0
    %473 = vmatpush1.msra.mxu0 0.0
    %474 = vmatprep.subr.mxu0 0.0
    %475 = vmatpush1.msra.mxu0 0.0
    %476 = vmatprep.subr.mxu0 0.0
    %477 = vmatpush1.msra.mxu0 0.0
    %478 = vmatprep.subr.mxu0 0.0
    %479 = vmatpush1.msra.mxu0 0.0
    %480 = vmatprep.subr.mxu0 0.0
    %481 = vmatpush1.msra.mxu0 0.0
    %482 = vmatprep.subr.mxu0 0.0
    %483 = vmatpush1.msra.mxu0 0.0
    %484 = vmatprep.subr.mxu0 0.0
    %485 = vmatpush1.msra.mxu0 0.0
    %486 = vmatprep.subr.mxu0 0.0
    %487 = vmatpush1.msra.mxu0 0.0
    %488 = vmatprep.subr.mxu0 0.0
    %489 = vmatpush1.msra.mxu0 0.0
    %490 = vmatprep.subr.mxu0 0.0
    %491 = vmatpush1.msra.mxu0 0.0
    %492 = vmatprep.subr.mxu0 0.0
    %493 = vmatpush1.msra.mxu0 0.0
    %494 = vmatprep.subr.mxu0 0.0
    %495 = vmatpush1.msra.mxu0 0.0
    %496 = vmatprep.subr.mxu0 0.0
    %497 = vmatpush1.msra.mxu0 0.0
    %498 = vmatprep.subr.mxu0 0.0
    %499 = vmatpush1.msra.mxu0 %v463
    %500 = vmatprep.subr.mxu0 0.0
    %501 = vmatpush2.msra.mxu0 0.0
    %502 = vmatprep.subr.mxu0 0.0
    %503 = vmatpush2.msra.mxu0 0.0
    %504 = vmatprep.subr.mxu0 0.0
    %505 = vmatpush2.msra.mxu0 0.0
    %506 = vmatprep.subr.mxu0 0.0
    %507 = vmatpush2.msra.mxu0 0.0
    %508 = vmatprep.subr.mxu0 0.0
    %509 = vmatpush2.msra.mxu0 0.0
    %510 = vmatprep.subr.mxu0 0.0
    %511 = vmatpush2.msra.mxu0 0.0
    %512 = vmatprep.subr.mxu0 0.0
    %513 = vmatpush2.msra.mxu0 0.0
    %514 = vmatprep.subr.mxu0 0.0
    %515 = vmatpush2.msra.mxu0 0.0
    %516 = vmatprep.subr.mxu0 0.0
    %517 = vmatpush2.msra.mxu0 0.0
    %518 = vmatprep.subr.mxu0 0.0
    %519 = vmatpush2.msra.mxu0 0.0
    %520 = vmatprep.subr.mxu0 0.0
    %521 = vmatpush2.msra.mxu0 0.0
    %522 = vmatprep.subr.mxu0 0.0
    %523 = vmatpush2.msra.mxu0 0.0
    %524 = vmatprep.subr.mxu0 0.0
    %525 = vmatpush2.msra.mxu0 0.0
    %526 = vmatprep.subr.mxu0 0.0
    %527 = vmatpush2.msra.mxu0 0.0
    %528 = vmatprep.subr.mxu0 0.0
    %529 = vmatpush2.msra.mxu0 0.0
    %530 = vmatprep.subr.mxu0 0.0
    %531 = vmatpush2.msra.mxu0 0.0
    %532 = vmatprep.mubr.f32.mxu0 0.0
    %533 = vmatmul.mubr.f32.gmra.mxu0 %v466
    %v534 = vpop.f32.mrf.mxu0
    %v535 = vadd.f32 0.0, %v534
    %v536 = vpop.f32.mrf.mxu0
    %537 = vdwg.mxu0
    %538 = vrot.lane.b32.xlu0 %v163, 112
    %v539 = vpop.permute.xlu0 %538
    %540 = vrot.lane.b32.xlu0 %v163, 80
    %v541 = vpop.permute.xlu0 %540
    %v542 = vsel %vm174, %v539, 0
    %v544 = vsel %vm174, %v541, 0
    %546 = vmatprep.subr.mxu0 0.0
    %547 = vmatpush1.xpose.msra.mxu0 0.0
    %548 = vmatprep.subr.mxu0 0.0
    %549 = vmatpush1.xpose.msra.mxu0 0.0
    %550 = vmatprep.subr.mxu0 0.0
    %551 = vmatpush1.xpose.msra.mxu0 0.0
    %552 = vmatprep.subr.mxu0 0.0
    %553 = vmatpush1.xpose.msra.mxu0 0.0
    %554 = vmatprep.subr.mxu0 0.0
    %555 = vmatpush1.xpose.msra.mxu0 0.0
    %556 = vmatprep.subr.mxu0 0.0
    %557 = vmatpush1.xpose.msra.mxu0 0.0
    %558 = vmatprep.subr.mxu0 0.0
    %559 = vmatpush1.xpose.msra.mxu0 0.0
    %560 = vmatprep.subr.mxu0 0.0
    %561 = vmatpush1.xpose.msra.mxu0 0.0
    %562 = vmatprep.subr.mxu0 0.0
    %563 = vmatpush1.xpose.msra.mxu0 0.0
    %564 = vmatprep.subr.mxu0 0.0
    %565 = vmatpush1.xpose.msra.mxu0 0.0
    %566 = vmatprep.subr.mxu0 0.0
    %567 = vmatpush1.xpose.msra.mxu0 0.0
    %568 = vmatprep.subr.mxu0 0.0
    %569 = vmatpush1.xpose.msra.mxu0 0.0
    %570 = vmatprep.subr.mxu0 0.0
    %571 = vmatpush1.xpose.msra.mxu0 0.0
    %572 = vmatprep.subr.mxu0 0.0
    %573 = vmatpush1.xpose.msra.mxu0 0.0
    %574 = vmatprep.subr.mxu0 0.0
    %575 = vmatpush1.xpose.msra.mxu0 0.0
    %576 = vmatprep.subr.mxu0 0.0
    %577 = vmatpush1.xpose.msra.mxu0 %v544
    %578 = vmatprep.subr.mxu0 0.0
    %579 = vmatpush2.xpose.msra.mxu0 0.0
    %580 = vmatprep.subr.mxu0 0.0
    %581 = vmatpush2.xpose.msra.mxu0 0.0
    %582 = vmatprep.subr.mxu0 0.0
    %583 = vmatpush2.xpose.msra.mxu0 0.0
    %584 = vmatprep.subr.mxu0 0.0
    %585 = vmatpush2.xpose.msra.mxu0 0.0
    %586 = vmatprep.subr.mxu0 0.0
    %587 = vmatpush2.xpose.msra.mxu0 0.0
    %588 = vmatprep.subr.mxu0 0.0
    %589 = vmatpush2.xpose.msra.mxu0 0.0
    %590 = vmatprep.subr.mxu0 0.0
    %591 = vmatpush2.xpose.msra.mxu0 0.0
    %592 = vmatprep.subr.mxu0 0.0
    %593 = vmatpush2.xpose.msra.mxu0 0.0
    %594 = vmatprep.subr.mxu0 0.0
    %595 = vmatpush2.xpose.msra.mxu0 0.0
    %596 = vmatprep.subr.mxu0 0.0
    %597 = vmatpush2.xpose.msra.mxu0 0.0
    %598 = vmatprep.subr.mxu0 0.0
    %599 = vmatpush2.xpose.msra.mxu0 0.0
    %600 = vmatprep.subr.mxu0 0.0
    %601 = vmatpush2.xpose.msra.mxu0 0.0
    %602 = vmatprep.subr.mxu0 0.0
    %603 = vmatpush2.xpose.msra.mxu0 0.0
    %604 = vmatprep.subr.mxu0 0.0
    %605 = vmatpush2.xpose.msra.mxu0 0.0
    %606 = vmatprep.subr.mxu0 0.0
    %607 = vmatpush2.xpose.msra.mxu0 0.0
    %608 = vmatprep.subr.mxu0 0.0
    %609 = vmatpush2.xpose.msra.mxu0 0.0
    %610 = vmatprep.mubr.f32.mxu0 0.0
    %611 = vmatmul.mubr.f32.gmra.mxu0 %v542
    %v612 = vpop.f32.mrf.mxu0
    %v613 = vadd.f32 0.0, %v612
    %v614 = vpop.f32.mrf.mxu0
    %615 = vdwg.mxu0
    %616 = vrot.lane.b32.xlu0 %v168, 112
    %v617 = vpop.permute.xlu0 %616
    %618 = vrot.lane.b32.xlu0 %v168, 80
    %v619 = vpop.permute.xlu0 %618
    %v620 = vsel %vm174, %v617, 0
    %v622 = vsel %vm174, %v619, 0
    %624 = vmatprep.subr.mxu0 0.0
    %625 = vmatpush1.xpose.msra.mxu0 0.0
    %626 = vmatprep.subr.mxu0 0.0
    %627 = vmatpush1.xpose.msra.mxu0 0.0
    %628 = vmatprep.subr.mxu0 0.0
    %629 = vmatpush1.xpose.msra.mxu0 0.0
    %630 = vmatprep.subr.mxu0 0.0
    %631 = vmatpush1.xpose.msra.mxu0 0.0
    %632 = vmatprep.subr.mxu0 0.0
    %633 = vmatpush1.xpose.msra.mxu0 0.0
    %634 = vmatprep.subr.mxu0 0.0
    %635 = vmatpush1.xpose.msra.mxu0 0.0
    %636 = vmatprep.subr.mxu0 0.0
    %637 = vmatpush1.xpose.msra.mxu0 0.0
    %638 = vmatprep.subr.mxu0 0.0
    %639 = vmatpush1.xpose.msra.mxu0 0.0
    %640 = vmatprep.subr.mxu0 0.0
    %641 = vmatpush1.xpose.msra.mxu0 0.0
    %642 = vmatprep.subr.mxu0 0.0
    %643 = vmatpush1.xpose.msra.mxu0 0.0
    %644 = vmatprep.subr.mxu0 0.0
    %645 = vmatpush1.xpose.msra.mxu0 0.0
    %646 = vmatprep.subr.mxu0 0.0
    %647 = vmatpush1.xpose.msra.mxu0 0.0
    %648 = vmatprep.subr.mxu0 0.0
    %649 = vmatpush1.xpose.msra.mxu0 0.0
    %650 = vmatprep.subr.mxu0 0.0
    %651 = vmatpush1.xpose.msra.mxu0 0.0
    %652 = vmatprep.subr.mxu0 0.0
    %653 = vmatpush1.xpose.msra.mxu0 0.0
    %654 = vmatprep.subr.mxu0 0.0
    %655 = vmatpush1.xpose.msra.mxu0 %v622
    %656 = vmatprep.subr.mxu0 0.0
    %657 = vmatpush2.xpose.msra.mxu0 0.0
    %658 = vmatprep.subr.mxu0 0.0
    %659 = vmatpush2.xpose.msra.mxu0 0.0
    %660 = vmatprep.subr.mxu0 0.0
    %661 = vmatpush2.xpose.msra.mxu0 0.0
    %662 = vmatprep.subr.mxu0 0.0
    %663 = vmatpush2.xpose.msra.mxu0 0.0
    %664 = vmatprep.subr.mxu0 0.0
    %665 = vmatpush2.xpose.msra.mxu0 0.0
    %666 = vmatprep.subr.mxu0 0.0
    %667 = vmatpush2.xpose.msra.mxu0 0.0
    %668 = vmatprep.subr.mxu0 0.0
    %669 = vmatpush2.xpose.msra.mxu0 0.0
    %670 = vmatprep.subr.mxu0 0.0
    %671 = vmatpush2.xpose.msra.mxu0 0.0
    %672 = vmatprep.subr.mxu0 0.0
    %673 = vmatpush2.xpose.msra.mxu0 0.0
    %674 = vmatprep.subr.mxu0 0.0
    %675 = vmatpush2.xpose.msra.mxu0 0.0
    %676 = vmatprep.subr.mxu0 0.0
    %677 = vmatpush2.xpose.msra.mxu0 0.0
    %678 = vmatprep.subr.mxu0 0.0
    %679 = vmatpush2.xpose.msra.mxu0 0.0
    %680 = vmatprep.subr.mxu0 0.0
    %681 = vmatpush2.xpose.msra.mxu0 0.0
    %682 = vmatprep.subr.mxu0 0.0
    %683 = vmatpush2.xpose.msra.mxu0 0.0
    %684 = vmatprep.subr.mxu0 0.0
    %685 = vmatpush2.xpose.msra.mxu0 0.0
    %686 = vmatprep.subr.mxu0 0.0
    %687 = vmatpush2.xpose.msra.mxu0 0.0
    %688 = vmatprep.mubr.f32.mxu0 0.0
    %689 = vmatmul.mubr.f32.gmra.mxu0 %v620
    %v690 = vpop.f32.mrf.mxu0
    %v691 = vadd.f32 0.0, %v690
    %v692 = vpop.f32.mrf.mxu0
    %693 = vdwg.mxu0
    %v694 = vmul.f32 %v613, 0.25
    %v695 = vmul.f32 %v691, 0.25
    %v696 = vadd.f32 %v694, %v354
    %v697 = vadd.f32 %v695, %v358
    %v698 = vsel %vm363, %v696, -inf
    %699 = vmax.xlane.f32.xlu0 %v698
    %v700 = vpop.xlane.xlu0 %699
    %v701 = vsel %vm363, %v697, -inf
    %702 = vmax.xlane.f32.xlu0 %v701
    %v703 = vpop.xlane.xlu0 %702
    %v704 = vsub.f32 %v696, %v700
    %v705 = vsub.f32 %v697, %v703
    %v706 = vmul.f32 %v704, 1.442695
    %v707 = vpow.pop %v706
    %v708 = vmul.f32 %v705, 1.442695
    %v709 = vpow.pop %v708
    %v710 = vsel %vm363, %v707, 0.0
    %711 = vadd.xlane.f32.xlu0 %v710
    %v712 = vpop.xlane.xlu0 %711
    %v713 = vsel %vm363, %v709, 0.0
    %714 = vadd.xlane.f32.xlu0 %v713
    %v715 = vpop.xlane.xlu0 %714
    %v716 = vrcp.pop %v712
    %v717 = vrcp.pop %v715
    %v718 = vmul.f32 %v707, %v716
    %v719 = vmul.f32 %v709, %v717
    %720 = vrot.lane.b32.xlu0 %v163, 48
    %v721 = vpop.permute.xlu0 %720
    %v724 = vsel %vm363, %v718, 0
    %726 = vmatprep.subr.mxu0 0.0
    %727 = vmatpush1.msra.mxu0 0.0
    %728 = vmatprep.subr.mxu0 0.0
    %729 = vmatpush1.msra.mxu0 0.0
    %730 = vmatprep.subr.mxu0 0.0
    %731 = vmatpush1.msra.mxu0 0.0
    %732 = vmatprep.subr.mxu0 0.0
    %733 = vmatpush1.msra.mxu0 0.0
    %734 = vmatprep.subr.mxu0 0.0
    %735 = vmatpush1.msra.mxu0 0.0
    %736 = vmatprep.subr.mxu0 0.0
    %737 = vmatpush1.msra.mxu0 0.0
    %738 = vmatprep.subr.mxu0 0.0
    %739 = vmatpush1.msra.mxu0 0.0
    %740 = vmatprep.subr.mxu0 0.0
    %741 = vmatpush1.msra.mxu0 0.0
    %742 = vmatprep.subr.mxu0 0.0
    %743 = vmatpush1.msra.mxu0 0.0
    %744 = vmatprep.subr.mxu0 0.0
    %745 = vmatpush1.msra.mxu0 0.0
    %746 = vmatprep.subr.mxu0 0.0
    %747 = vmatpush1.msra.mxu0 0.0
    %748 = vmatprep.subr.mxu0 0.0
    %749 = vmatpush1.msra.mxu0 0.0
    %750 = vmatprep.subr.mxu0 0.0
    %751 = vmatpush1.msra.mxu0 0.0
    %752 = vmatprep.subr.mxu0 0.0
    %753 = vmatpush1.msra.mxu0 0.0
    %754 = vmatprep.subr.mxu0 0.0
    %755 = vmatpush1.msra.mxu0 0.0
    %756 = vmatprep.subr.mxu0 0.0
    %757 = vmatpush1.msra.mxu0 %v721
    %758 = vmatprep.subr.mxu0 0.0
    %759 = vmatpush2.msra.mxu0 0.0
    %760 = vmatprep.subr.mxu0 0.0
    %761 = vmatpush2.msra.mxu0 0.0
    %762 = vmatprep.subr.mxu0 0.0
    %763 = vmatpush2.msra.mxu0 0.0
    %764 = vmatprep.subr.mxu0 0.0
    %765 = vmatpush2.msra.mxu0 0.0
    %766 = vmatprep.subr.mxu0 0.0
    %767 = vmatpush2.msra.mxu0 0.0
    %768 = vmatprep.subr.mxu0 0.0
    %769 = vmatpush2.msra.mxu0 0.0
    %770 = vmatprep.subr.mxu0 0.0
    %771 = vmatpush2.msra.mxu0 0.0
    %772 = vmatprep.subr.mxu0 0.0
    %773 = vmatpush2.msra.mxu0 0.0
    %774 = vmatprep.subr.mxu0 0.0
    %775 = vmatpush2.msra.mxu0 0.0
    %776 = vmatprep.subr.mxu0 0.0
    %777 = vmatpush2.msra.mxu0 0.0
    %778 = vmatprep.subr.mxu0 0.0
    %779 = vmatpush2.msra.mxu0 0.0
    %780 = vmatprep.subr.mxu0 0.0
    %781 = vmatpush2.msra.mxu0 0.0
    %782 = vmatprep.subr.mxu0 0.0
    %783 = vmatpush2.msra.mxu0 0.0
    %784 = vmatprep.subr.mxu0 0.0
    %785 = vmatpush2.msra.mxu0 0.0
    %786 = vmatprep.subr.mxu0 0.0
    %787 = vmatpush2.msra.mxu0 0.0
    %788 = vmatprep.subr.mxu0 0.0
    %789 = vmatpush2.msra.mxu0 0.0
    %790 = vmatprep.mubr.f32.mxu0 0.0
    %791 = vmatmul.mubr.f32.gmra.mxu0 %v724
    %v792 = vpop.f32.mrf.mxu0
    %v793 = vadd.f32 0.0, %v792
    %v794 = vpop.f32.mrf.mxu0
    %795 = vdwg.mxu0
    %796 = vrot.lane.b32.xlu0 %v168, 48
    %v797 = vpop.permute.xlu0 %796
    %v800 = vsel %vm363, %v719, 0
    %802 = vmatprep.subr.mxu0 0.0
    %803 = vmatpush1.msra.mxu0 0.0
    %804 = vmatprep.subr.mxu0 0.0
    %805 = vmatpush1.msra.mxu0 0.0
    %806 = vmatprep.subr.mxu0 0.0
    %807 = vmatpush1.msra.mxu0 0.0
    %808 = vmatprep.subr.mxu0 0.0
    %809 = vmatpush1.msra.mxu0 0.0
    %810 = vmatprep.subr.mxu0 0.0
    %811 = vmatpush1.msra.mxu0 0.0
    %812 = vmatprep.subr.mxu0 0.0
    %813 = vmatpush1.msra.mxu0 0.0
    %814 = vmatprep.subr.mxu0 0.0
    %815 = vmatpush1.msra.mxu0 0.0
    %816 = vmatprep.subr.mxu0 0.0
    %817 = vmatpush1.msra.mxu0 0.0
    %818 = vmatprep.subr.mxu0 0.0
    %819 = vmatpush1.msra.mxu0 0.0
    %820 = vmatprep.subr.mxu0 0.0
    %821 = vmatpush1.msra.mxu0 0.0
    %822 = vmatprep.subr.mxu0 0.0
    %823 = vmatpush1.msra.mxu0 0.0
    %824 = vmatprep.subr.mxu0 0.0
    %825 = vmatpush1.msra.mxu0 0.0
    %826 = vmatprep.subr.mxu0 0.0
    %827 = vmatpush1.msra.mxu0 0.0
    %828 = vmatprep.subr.mxu0 0.0
    %829 = vmatpush1.msra.mxu0 0.0
    %830 = vmatprep.subr.mxu0 0.0
    %831 = vmatpush1.msra.mxu0 0.0
    %832 = vmatprep.subr.mxu0 0.0
    %833 = vmatpush1.msra.mxu0 %v797
    %834 = vmatprep.subr.mxu0 0.0
    %835 = vmatpush2.msra.mxu0 0.0
    %836 = vmatprep.subr.mxu0 0.0
    %837 = vmatpush2.msra.mxu0 0.0
    %838 = vmatprep.subr.mxu0 0.0
    %839 = vmatpush2.msra.mxu0 0.0
    %840 = vmatprep.subr.mxu0 0.0
    %841 = vmatpush2.msra.mxu0 0.0
    %842 = vmatprep.subr.mxu0 0.0
    %843 = vmatpush2.msra.mxu0 0.0
    %844 = vmatprep.subr.mxu0 0.0
    %845 = vmatpush2.msra.mxu0 0.0
    %846 = vmatprep.subr.mxu0 0.0
    %847 = vmatpush2.msra.mxu0 0.0
    %848 = vmatprep.subr.mxu0 0.0
    %849 = vmatpush2.msra.mxu0 0.0
    %850 = vmatprep.subr.mxu0 0.0
    %851 = vmatpush2.msra.mxu0 0.0
    %852 = vmatprep.subr.mxu0 0.0
    %853 = vmatpush2.msra.mxu0 0.0
    %854 = vmatprep.subr.mxu0 0.0
    %855 = vmatpush2.msra.mxu0 0.0
    %856 = vmatprep.subr.mxu0 0.0
    %857 = vmatpush2.msra.mxu0 0.0
    %858 = vmatprep.subr.mxu0 0.0
    %859 = vmatpush2.msra.mxu0 0.0
    %860 = vmatprep.subr.mxu0 0.0
    %861 = vmatpush2.msra.mxu0 0.0
    %862 = vmatprep.subr.mxu0 0.0
    %863 = vmatpush2.msra.mxu0 0.0
    %864 = vmatprep.subr.mxu0 0.0
    %865 = vmatpush2.msra.mxu0 0.0
    %866 = vmatprep.mubr.f32.mxu0 0.0
    %867 = vmatmul.mubr.f32.gmra.mxu0 %v800
    %v868 = vpop.f32.mrf.mxu0
    %v869 = vadd.f32 0.0, %v868
    %v870 = vpop.f32.mrf.mxu0
    %871 = vdwg.mxu0
    %874 = vrot.lane.b32.xlu0 %v793, 16
    %v875 = vpop.permute.xlu0 %874
    %876 = vrot.lane.b32.xlu0 %v869, 16
    %v877 = vpop.permute.xlu0 %876
    %v880 = vsel %vm174, %v459, %v875
    %v881 = vsel %vm174, %v535, %v877
    %v882 = vlaneseq
    %v883 = vshrl.u32 %v882, 7
    %v884 = vsub.s32 1, %v883
    %v885 = vrot.slane %v85, %v884
    %890 = vrot.lane.b32.xlu0 %v69, 32
    %v891 = vpop.permute.xlu0 %890
    %892 = vrot.lane.b32.xlu0 %v71, 32
    %v893 = vpop.permute.xlu0 %892
    %894 = vrot.lane.b32.xlu0 %v73, 32
    %v895 = vpop.permute.xlu0 %894
    %896 = vrot.lane.b32.xlu0 %v75, 32
    %v897 = vpop.permute.xlu0 %896
    %v903 = vsel %vm29, %v880, 0
    %v906 = vsel %vm29, %v881, 0
    %908 = vmatprep.subr.mxu0 0.0
    %909 = vmatpush1.msra.mxu0 0.0
    %910 = vmatprep.subr.mxu0 0.0
    %911 = vmatpush1.msra.mxu0 0.0
    %912 = vmatprep.subr.mxu0 0.0
    %913 = vmatpush1.msra.mxu0 0.0
    %914 = vmatprep.subr.mxu0 0.0
    %915 = vmatpush1.msra.mxu0 0.0
    %916 = vmatprep.subr.mxu0 0.0
    %917 = vmatpush1.msra.mxu0 0.0
    %918 = vmatprep.subr.mxu0 0.0
    %919 = vmatpush1.msra.mxu0 0.0
    %920 = vmatprep.subr.mxu0 0.0
    %921 = vmatpush1.msra.mxu0 0.0
    %922 = vmatprep.subr.mxu0 0.0
    %923 = vmatpush1.msra.mxu0 0.0
    %924 = vmatprep.subr.mxu0 0.0
    %925 = vmatpush1.msra.mxu0 0.0
    %926 = vmatprep.subr.mxu0 0.0
    %927 = vmatpush1.msra.mxu0 0.0
    %928 = vmatprep.subr.mxu0 0.0
    %929 = vmatpush1.msra.mxu0 0.0
    %930 = vmatprep.subr.mxu0 0.0
    %931 = vmatpush1.msra.mxu0 0.0
    %932 = vmatprep.subr.mxu0 0.0
    %933 = vmatpush1.msra.mxu0 %v897
    %934 = vmatprep.subr.mxu0 0.0
    %935 = vmatpush1.msra.mxu0 %v895
    %936 = vmatprep.subr.mxu0 0.0
    %937 = vmatpush1.msra.mxu0 %v893
    %938 = vmatprep.subr.mxu0 0.0
    %939 = vmatpush1.msra.mxu0 %v891
    %940 = vmatprep.subr.mxu0 0.0
    %941 = vmatpush2.msra.mxu0 0.0
    %942 = vmatprep.subr.mxu0 0.0
    %943 = vmatpush2.msra.mxu0 0.0
    %944 = vmatprep.subr.mxu0 0.0
    %945 = vmatpush2.msra.mxu0 0.0
    %946 = vmatprep.subr.mxu0 0.0
    %947 = vmatpush2.msra.mxu0 0.0
    %948 = vmatprep.subr.mxu0 0.0
    %949 = vmatpush2.msra.mxu0 0.0
    %950 = vmatprep.subr.mxu0 0.0
    %951 = vmatpush2.msra.mxu0 0.0
    %952 = vmatprep.subr.mxu0 0.0
    %953 = vmatpush2.msra.mxu0 0.0
    %954 = vmatprep.subr.mxu0 0.0
    %955 = vmatpush2.msra.mxu0 0.0
    %956 = vmatprep.subr.mxu0 0.0
    %957 = vmatpush2.msra.mxu0 0.0
    %958 = vmatprep.subr.mxu0 0.0
    %959 = vmatpush2.msra.mxu0 0.0
    %960 = vmatprep.subr.mxu0 0.0
    %961 = vmatpush2.msra.mxu0 0.0
    %962 = vmatprep.subr.mxu0 0.0
    %963 = vmatpush2.msra.mxu0 0.0
    %964 = vmatprep.subr.mxu0 0.0
    %965 = vmatpush2.msra.mxu0 0.0
    %966 = vmatprep.subr.mxu0 0.0
    %967 = vmatpush2.msra.mxu0 0.0
    %968 = vmatprep.subr.mxu0 0.0
    %969 = vmatpush2.msra.mxu0 0.0
    %970 = vmatprep.subr.mxu0 0.0
    %971 = vmatpush2.msra.mxu0 0.0
    %972 = vmatprep.mubr.f32.mxu0 0.0
    %973 = vmatmul.mubr.f32.gmra.mxu0 %v903
    %v974 = vpop.f32.mrf.mxu0
    %v975 = vadd.f32 %v885, %v974
    %v976 = vpop.f32.mrf.mxu0
    %977 = vmatprep.mubr.f32.mxu0 0.0
    %978 = vmatmul.mubr.f32.gmra.mxu0 %v906
    %v979 = vpop.f32.mrf.mxu0
    %v980 = vadd.f32 %v885, %v979
    %v981 = vpop.f32.mrf.mxu0
    %982 = vdwg.mxu0
    %v983 = vadd.f32 %v67, %v975
    %v984 = vadd.f32 %v68, %v980
    %v985 = vsel %vm29, %v983, 0.0
    %986 = vadd.xlane.f32.xlu0 %v985
    %v987 = vpop.xlane.xlu0 %986
    %v988 = vsel %vm29, %v984, 0.0
    %989 = vadd.xlane.f32.xlu0 %v988
    %v990 = vpop.xlane.xlu0 %989
    %v991 = vmul.f32 %v987, %v36
    %v992 = vmul.f32 %v990, %v36
    %v993 = vsub.f32 %v983, %v991
    %v994 = vsub.f32 %v984, %v992
    %v995 = vmul.f32 %v993, %v993
    %v996 = vmul.f32 %v994, %v994
    %v997 = vsel %vm29, %v995, 0.0
    %998 = vadd.xlane.f32.xlu0 %v997
    %v999 = vpop.xlane.xlu0 %998
    %v1000 = vsel %vm29, %v996, 0.0
    %1001 = vadd.xlane.f32.xlu0 %v1000
    %v1002 = vpop.xlane.xlu0 %1001
    %v1003 = vmul.f32 %v999, %v36
    %v1004 = vmul.f32 %v1002, %v36
    %v1005 = vadd.f32 %v1003, 1e-12
    %v1006 = vadd.f32 %v1004, 1e-12
    %v1007 = vrsqrt.pop %v1005
    %v1008 = vrsqrt.pop %v1006
    %v1009 = vmul.f32 %v993, %v1007
    %v1010 = vmul.f32 %v994, %v1008
    %v1011 = vlaneseq
    %v1012 = vshrl.u32 %v1011, 7
    %v1013 = vsub.s32 4, %v1012
    %v1014 = vrot.slane %v85, %v1013
    %v1015 = vmul.f32 %v1009, %v1014
    %v1016 = vmul.f32 %v1010, %v1014
    %v1017 = vlaneseq
    %v1018 = vshrl.u32 %v1017, 7
    %v1019 = vsub.s32 5, %v1018
    %v1020 = vrot.slane %v85, %v1019
    %v1021 = vadd.f32 %v1015, %v1020
    %v1022 = vadd.f32 %v1016, %v1020
    %v1023 = vlaneseq
    %v1024 = vshrl.u32 %v1023, 7
    %v1025 = vsub.s32 2, %v1024
    %v1026 = vrot.slane %v85, %v1025
    %v1028 = vsel %vm29, %v1021, 0
    %v1031 = vsel %vm29, %v1022, 0
    %1033 = vmatprep.subr.mxu0 0.0
    %1034 = vmatpush1.msra.mxu0 0.0
    %1035 = vmatprep.subr.mxu0 0.0
    %1036 = vmatpush1.msra.mxu0 0.0
    %1037 = vmatprep.subr.mxu0 0.0
    %1038 = vmatpush1.msra.mxu0 0.0
    %1039 = vmatprep.subr.mxu0 0.0
    %1040 = vmatpush1.msra.mxu0 0.0
    %1041 = vmatprep.subr.mxu0 0.0
    %1042 = vmatpush1.msra.mxu0 0.0
    %1043 = vmatprep.subr.mxu0 0.0
    %1044 = vmatpush1.msra.mxu0 0.0
    %1045 = vmatprep.subr.mxu0 0.0
    %1046 = vmatpush1.msra.mxu0 0.0
    %1047 = vmatprep.subr.mxu0 0.0
    %1048 = vmatpush1.msra.mxu0 0.0
    %1049 = vmatprep.subr.mxu0 0.0
    %1050 = vmatpush1.msra.mxu0 0.0
    %1051 = vmatprep.subr.mxu0 0.0
    %1052 = vmatpush1.msra.mxu0 0.0
    %1053 = vmatprep.subr.mxu0 0.0
    %1054 = vmatpush1.msra.mxu0 0.0
    %1055 = vmatprep.subr.mxu0 0.0
    %1056 = vmatpush1.msra.mxu0 0.0
    %1057 = vmatprep.subr.mxu0 0.0
    %1058 = vmatpush1.msra.mxu0 %v76
    %1059 = vmatprep.subr.mxu0 0.0
    %1060 = vmatpush1.msra.mxu0 %v74
    %1061 = vmatprep.subr.mxu0 0.0
    %1062 = vmatpush1.msra.mxu0 %v72
    %1063 = vmatprep.subr.mxu0 0.0
    %1064 = vmatpush1.msra.mxu0 %v70
    %1065 = vmatprep.subr.mxu0 0.0
    %1066 = vmatpush2.msra.mxu0 0.0
    %1067 = vmatprep.subr.mxu0 0.0
    %1068 = vmatpush2.msra.mxu0 0.0
    %1069 = vmatprep.subr.mxu0 0.0
    %1070 = vmatpush2.msra.mxu0 0.0
    %1071 = vmatprep.subr.mxu0 0.0
    %1072 = vmatpush2.msra.mxu0 0.0
    %1073 = vmatprep.subr.mxu0 0.0
    %1074 = vmatpush2.msra.mxu0 0.0
    %1075 = vmatprep.subr.mxu0 0.0
    %1076 = vmatpush2.msra.mxu0 0.0
    %1077 = vmatprep.subr.mxu0 0.0
    %1078 = vmatpush2.msra.mxu0 0.0
    %1079 = vmatprep.subr.mxu0 0.0
    %1080 = vmatpush2.msra.mxu0 0.0
    %1081 = vmatprep.subr.mxu0 0.0
    %1082 = vmatpush2.msra.mxu0 0.0
    %1083 = vmatprep.subr.mxu0 0.0
    %1084 = vmatpush2.msra.mxu0 0.0
    %1085 = vmatprep.subr.mxu0 0.0
    %1086 = vmatpush2.msra.mxu0 0.0
    %1087 = vmatprep.subr.mxu0 0.0
    %1088 = vmatpush2.msra.mxu0 0.0
    %1089 = vmatprep.subr.mxu0 0.0
    %1090 = vmatpush2.msra.mxu0 0.0
    %1091 = vmatprep.subr.mxu0 0.0
    %1092 = vmatpush2.msra.mxu0 0.0
    %1093 = vmatprep.subr.mxu0 0.0
    %1094 = vmatpush2.msra.mxu0 0.0
    %1095 = vmatprep.subr.mxu0 0.0
    %1096 = vmatpush2.msra.mxu0 0.0
    %1097 = vmatprep.mubr.f32.mxu0 0.0
    %1098 = vmatmul.mubr.f32.gmra.mxu0 %v1028
    %v1099 = vpop.f32.mrf.mxu0
    %v1100 = vadd.f32 %v1026, %v1099
    %v1101 = vpop.f32.mrf.mxu0
    %1102 = vmatprep.mubr.f32.mxu0 0.0
    %1103 = vmatmul.mubr.f32.gmra.mxu0 %v1031
    %v1104 = vpop.f32.mrf.mxu0
    %v1105 = vadd.f32 %v1026, %v1104
    %v1106 = vpop.f32.mrf.mxu0
    %1107 = vdwg.mxu0
    %v1108 = vmul.f32 %v1100, 0.5
    %v1109 = vmul.f32 %v1105, 0.5
    %v1110 = vmul.f32 %v1100, 0.044715
    %v1111 = vmul.f32 %v1105, 0.044715
    %v1112 = vmul.f32 %v1110, %v1100
    %v1113 = vmul.f32 %v1111, %v1105
    %v1114 = vmul.f32 %v1112, %v1100
    %v1115 = vmul.f32 %v1113, %v1105
    %v1116 = vadd.f32 %v1100, %v1114
    %v1117 = vadd.f32 %v1105, %v1115
    %v1118 = vmul.f32 %v1116, 0.7978846
    %v1119 = vmul.f32 %v1117, 0.7978846
    %v1120 = vtanh.pop %v1118
    %v1121 = vtanh.pop %v1119
    %v1122 = vadd.f32 %v1120, 1.0
    %v1123 = vadd.f32 %v1121, 1.0
    %v1124 = vmul.f32 %v1108, %v1122
    %v1125 = vmul.f32 %v1109, %v1123
    %v1126 = vlaneseq
    %v1127 = vshrl.u32 %v1126, 7
    %v1128 = vsub.s32 3, %v1127
    %v1129 = vrot.slane %v85, %v1128
    %vm1130 = vcmask 523264
    %v1132 = vsel %vm1130, %v1124, 0
    %v1135 = vsel %vm1130, %v1125, 0
    %1137 = vmatprep.subr.mxu0 0.0
    %1138 = vmatpush1.msra.mxu0 0.0
    %1139 = vmatprep.subr.mxu0 0.0
    %1140 = vmatpush1.msra.mxu0 0.0
    %1141 = vmatprep.subr.mxu0 0.0
    %1142 = vmatpush1.msra.mxu0 0.0
    %1143 = vmatprep.subr.mxu0 0.0
    %1144 = vmatpush1.msra.mxu0 0.0
    %1145 = vmatprep.subr.mxu0 0.0
    %1146 = vmatpush1.msra.mxu0 0.0
    %1147 = vmatprep.subr.mxu0 0.0
    %1148 = vmatpush1.msra.mxu0 0.0
    %1149 = vmatprep.subr.mxu0 0.0
    %1150 = vmatpush1.msra.mxu0 0.0
    %1151 = vmatprep.subr.mxu0 0.0
    %1152 = vmatpush1.msra.mxu0 0.0
    %1153 = vmatprep.subr.mxu0 0.0
    %1154 = vmatpush1.msra.mxu0 %v84
    %1155 = vmatprep.subr.mxu0 0.0
    %1156 = vmatpush1.msra.mxu0 %v83
    %1157 = vmatprep.subr.mxu0 0.0
    %1158 = vmatpush1.msra.mxu0 %v82
    %1159 = vmatprep.subr.mxu0 0.0
    %1160 = vmatpush1.msra.mxu0 %v81
    %1161 = vmatprep.subr.mxu0 0.0
    %1162 = vmatpush1.msra.mxu0 %v80
    %1163 = vmatprep.subr.mxu0 0.0
    %1164 = vmatpush1.msra.mxu0 %v79
    %1165 = vmatprep.subr.mxu0 0.0
    %1166 = vmatpush1.msra.mxu0 %v78
    %1167 = vmatprep.subr.mxu0 0.0
    %1168 = vmatpush1.msra.mxu0 %v77
    %1169 = vmatprep.subr.mxu0 0.0
    %1170 = vmatpush2.msra.mxu0 0.0
    %1171 = vmatprep.subr.mxu0 0.0
    %1172 = vmatpush2.msra.mxu0 0.0
    %1173 = vmatprep.subr.mxu0 0.0
    %1174 = vmatpush2.msra.mxu0 0.0
    %1175 = vmatprep.subr.mxu0 0.0
    %1176 = vmatpush2.msra.mxu0 0.0
    %1177 = vmatprep.subr.mxu0 0.0
    %1178 = vmatpush2.msra.mxu0 0.0
    %1179 = vmatprep.subr.mxu0 0.0
    %1180 = vmatpush2.msra.mxu0 0.0
    %1181 = vmatprep.subr.mxu0 0.0
    %1182 = vmatpush2.msra.mxu0 0.0
    %1183 = vmatprep.subr.mxu0 0.0
    %1184 = vmatpush2.msra.mxu0 0.0
    %1185 = vmatprep.subr.mxu0 0.0
    %1186 = vmatpush2.msra.mxu0 0.0
    %1187 = vmatprep.subr.mxu0 0.0
    %1188 = vmatpush2.msra.mxu0 0.0
    %1189 = vmatprep.subr.mxu0 0.0
    %1190 = vmatpush2.msra.mxu0 0.0
    %1191 = vmatprep.subr.mxu0 0.0
    %1192 = vmatpush2.msra.mxu0 0.0
    %1193 = vmatprep.subr.mxu0 0.0
    %1194 = vmatpush2.msra.mxu0 0.0
    %1195 = vmatprep.subr.mxu0 0.0
    %1196 = vmatpush2.msra.mxu0 0.0
    %1197 = vmatprep.subr.mxu0 0.0
    %1198 = vmatpush2.msra.mxu0 0.0
    %1199 = vmatprep.subr.mxu0 0.0
    %1200 = vmatpush2.msra.mxu0 0.0
    %1201 = vmatprep.mubr.f32.mxu0 0.0
    %1202 = vmatmul.mubr.f32.gmra.mxu0 %v1132
    %v1203 = vpop.f32.mrf.mxu0
    %v1204 = vadd.f32 %v1129, %v1203
    %v1205 = vpop.f32.mrf.mxu0
    %1206 = vmatprep.mubr.f32.mxu0 0.0
    %1207 = vmatmul.mubr.f32.gmra.mxu0 %v1135
    %v1208 = vpop.f32.mrf.mxu0
    %v1209 = vadd.f32 %v1129, %v1208
    %v1210 = vpop.f32.mrf.mxu0
    %1211 = vdwg.mxu0
    %v1212 = vadd.f32 %v1021, %v1204
    %v1213 = vadd.f32 %v1022, %v1209
    %v1214 = vsel %vm29, %v1212, 0.0
    %1215 = vadd.xlane.f32.xlu0 %v1214
    %v1216 = vpop.xlane.xlu0 %1215
    %v1217 = vsel %vm29, %v1213, 0.0
    %1218 = vadd.xlane.f32.xlu0 %v1217
    %v1219 = vpop.xlane.xlu0 %1218
    %v1220 = vmul.f32 %v1216, %v36
    %v1221 = vmul.f32 %v1219, %v36
    %v1222 = vsub.f32 %v1212, %v1220
    %v1223 = vsub.f32 %v1213, %v1221
    %v1224 = vmul.f32 %v1222, %v1222
    %v1225 = vmul.f32 %v1223, %v1223
    %v1226 = vsel %vm29, %v1224, 0.0
    %1227 = vadd.xlane.f32.xlu0 %v1226
    %v1228 = vpop.xlane.xlu0 %1227
    %v1229 = vsel %vm29, %v1225, 0.0
    %1230 = vadd.xlane.f32.xlu0 %v1229
    %v1231 = vpop.xlane.xlu0 %1230
    %v1232 = vmul.f32 %v1228, %v36
    %v1233 = vmul.f32 %v1231, %v36
    %v1234 = vadd.f32 %v1232, 1e-12
    %v1235 = vadd.f32 %v1233, 1e-12
    %v1236 = vrsqrt.pop %v1234
    %v1237 = vrsqrt.pop %v1235
    %v1238 = vmul.f32 %v1222, %v1236
    %v1239 = vmul.f32 %v1223, %v1237
    %v1240 = vlaneseq
    %v1241 = vshrl.u32 %v1240, 7
    %v1242 = vsub.s32 6, %v1241
    %v1243 = vrot.slane %v85, %v1242
    %v1244 = vmul.f32 %v1238, %v1243
    %v1245 = vmul.f32 %v1239, %v1243
    %v1246 = vlaneseq
    %v1247 = vshrl.u32 %v1246, 7
    %v1248 = vsub.s32 7, %v1247
    %v1249 = vrot.slane %v85, %v1248
    %v1250 = vadd.f32 %v1244, %v1249
    %v1251 = vadd.f32 %v1245, %v1249
    %s1252 = scalar_lea.vmem %s3, 64
    %v1253 = vld [vmem:[%s1252] sm:$0xff]
    %v1254 = vld [vmem:[%s1252 + $0x8] sm:$0xff]
    %v1255 = vld [vmem:[%s1252 + $0x10] sm:$0xff]
    %v1256 = vld [vmem:[%s1252 + $0x18] sm:$0xff]
    %v1257 = vld [vmem:[%s1252 + $0x20] sm:$0xff]
    %v1258 = vld [vmem:[%s1252 + $0x28] sm:$0xff]
    %v1259 = vld [vmem:[%s1252 + $0x30] sm:$0xff]
    %v1260 = vld [vmem:[%s1252 + $0x38] sm:$0xff]
    %s1261 = scalar_lea.vmem %s4, 64
    %v1262 = vld [vmem:[%s1261] sm:$0xff]
    %v1263 = vld [vmem:[%s1261 + $0x8] sm:$0xff]
    %v1264 = vld [vmem:[%s1261 + $0x10] sm:$0xff]
    %v1265 = vld [vmem:[%s1261 + $0x18] sm:$0xff]
    %v1266 = vld [vmem:[%s1261 + $0x20] sm:$0xff]
    %v1267 = vld [vmem:[%s1261 + $0x28] sm:$0xff]
    %v1268 = vld [vmem:[%s1261 + $0x30] sm:$0xff]
    %v1269 = vld [vmem:[%s1261 + $0x38] sm:$0xff]
    %s1270 = scalar_lea.vmem %s5, 8
    %v1271 = vld [vmem:[%s1270] sm:$0xff]
    %v1272 = vlaneseq
    %v1273 = vshrl.u32 %v1272, 7
    %v1274 = vsub.s32 0, %v1273
    %v1275 = vrot.slane %v1271, %v1274
    %v1277 = vsel %vm29, %v1250, 0
    %v1280 = vsel %vm29, %v1251, 0
    %1282 = vmatprep.subr.mxu0 0.0
    %1283 = vmatpush1.msra.mxu0 0.0
    %1284 = vmatprep.subr.mxu0 0.0
    %1285 = vmatpush1.msra.mxu0 0.0
    %1286 = vmatprep.subr.mxu0 0.0
    %1287 = vmatpush1.msra.mxu0 0.0
    %1288 = vmatprep.subr.mxu0 0.0
    %1289 = vmatpush1.msra.mxu0 0.0
    %1290 = vmatprep.subr.mxu0 0.0
    %1291 = vmatpush1.msra.mxu0 0.0
    %1292 = vmatprep.subr.mxu0 0.0
    %1293 = vmatpush1.msra.mxu0 0.0
    %1294 = vmatprep.subr.mxu0 0.0
    %1295 = vmatpush1.msra.mxu0 0.0
    %1296 = vmatprep.subr.mxu0 0.0
    %1297 = vmatpush1.msra.mxu0 0.0
    %1298 = vmatprep.subr.mxu0 0.0
    %1299 = vmatpush1.msra.mxu0 0.0
    %1300 = vmatprep.subr.mxu0 0.0
    %1301 = vmatpush1.msra.mxu0 0.0
    %1302 = vmatprep.subr.mxu0 0.0
    %1303 = vmatpush1.msra.mxu0 0.0
    %1304 = vmatprep.subr.mxu0 0.0
    %1305 = vmatpush1.msra.mxu0 0.0
    %1306 = vmatprep.subr.mxu0 0.0
    %1307 = vmatpush1.msra.mxu0 %v1259
    %1308 = vmatprep.subr.mxu0 0.0
    %1309 = vmatpush1.msra.mxu0 %v1257
    %1310 = vmatprep.subr.mxu0 0.0
    %1311 = vmatpush1.msra.mxu0 %v1255
    %1312 = vmatprep.subr.mxu0 0.0
    %1313 = vmatpush1.msra.mxu0 %v1253
    %1314 = vmatprep.subr.mxu0 0.0
    %1315 = vmatpush2.msra.mxu0 0.0
    %1316 = vmatprep.subr.mxu0 0.0
    %1317 = vmatpush2.msra.mxu0 0.0
    %1318 = vmatprep.subr.mxu0 0.0
    %1319 = vmatpush2.msra.mxu0 0.0
    %1320 = vmatprep.subr.mxu0 0.0
    %1321 = vmatpush2.msra.mxu0 0.0
    %1322 = vmatprep.subr.mxu0 0.0
    %1323 = vmatpush2.msra.mxu0 0.0
    %1324 = vmatprep.subr.mxu0 0.0
    %1325 = vmatpush2.msra.mxu0 0.0
    %1326 = vmatprep.subr.mxu0 0.0
    %1327 = vmatpush2.msra.mxu0 0.0
    %1328 = vmatprep.subr.mxu0 0.0
    %1329 = vmatpush2.msra.mxu0 0.0
    %1330 = vmatprep.subr.mxu0 0.0
    %1331 = vmatpush2.msra.mxu0 0.0
    %1332 = vmatprep.subr.mxu0 0.0
    %1333 = vmatpush2.msra.mxu0 0.0
    %1334 = vmatprep.subr.mxu0 0.0
    %1335 = vmatpush2.msra.mxu0 0.0
    %1336 = vmatprep.subr.mxu0 0.0
    %1337 = vmatpush2.msra.mxu0 0.0
    %1338 = vmatprep.subr.mxu0 0.0
    %1339 = vmatpush2.msra.mxu0 0.0
    %1340 = vmatprep.subr.mxu0 0.0
    %1341 = vmatpush2.msra.mxu0 0.0
    %1342 = vmatprep.subr.mxu0 0.0
    %1343 = vmatpush2.msra.mxu0 0.0
    %1344 = vmatprep.subr.mxu0 0.0
    %1345 = vmatpush2.msra.mxu0 0.0
    %1346 = vmatprep.mubr.f32.mxu0 0.0
    %1347 = vmatmul.mubr.f32.gmra.mxu0 %v1277
    %v1348 = vpop.f32.mrf.mxu0
    %v1349 = vadd.f32 %v1275, %v1348
    %v1350 = vpop.f32.mrf.mxu0
    %1351 = vmatprep.mubr.f32.mxu0 0.0
    %1352 = vmatmul.mubr.f32.gmra.mxu0 %v1280
    %v1353 = vpop.f32.mrf.mxu0
    %v1354 = vadd.f32 %v1275, %v1353
    %v1355 = vpop.f32.mrf.mxu0
    %1356 = vdwg.mxu0
    %1358 = vrot.lane.b32.xlu0 %v1349, 96
    %v1359 = vpop.permute.xlu0 %1358
    %v1360 = vsel %vm174, %v1349, 0
    %v1362 = vsel %vm174, %v1359, 0
    %1364 = vmatprep.subr.mxu0 0.0
    %1365 = vmatpush1.xpose.msra.mxu0 0.0
    %1366 = vmatprep.subr.mxu0 0.0
    %1367 = vmatpush1.xpose.msra.mxu0 0.0
    %1368 = vmatprep.subr.mxu0 0.0
    %1369 = vmatpush1.xpose.msra.mxu0 0.0
    %1370 = vmatprep.subr.mxu0 0.0
    %1371 = vmatpush1.xpose.msra.mxu0 0.0
    %1372 = vmatprep.subr.mxu0 0.0
    %1373 = vmatpush1.xpose.msra.mxu0 0.0
    %1374 = vmatprep.subr.mxu0 0.0
    %1375 = vmatpush1.xpose.msra.mxu0 0.0
    %1376 = vmatprep.subr.mxu0 0.0
    %1377 = vmatpush1.xpose.msra.mxu0 0.0
    %1378 = vmatprep.subr.mxu0 0.0
    %1379 = vmatpush1.xpose.msra.mxu0 0.0
    %1380 = vmatprep.subr.mxu0 0.0
    %1381 = vmatpush1.xpose.msra.mxu0 0.0
    %1382 = vmatprep.subr.mxu0 0.0
    %1383 = vmatpush1.xpose.msra.mxu0 0.0
    %1384 = vmatprep.subr.mxu0 0.0
    %1385 = vmatpush1.xpose.msra.mxu0 0.0
    %1386 = vmatprep.subr.mxu0 0.0
    %1387 = vmatpush1.xpose.msra.mxu0 0.0
    %1388 = vmatprep.subr.mxu0 0.0
    %1389 = vmatpush1.xpose.msra.mxu0 0.0
    %1390 = vmatprep.subr.mxu0 0.0
    %1391 = vmatpush1.xpose.msra.mxu0 0.0
    %1392 = vmatprep.subr.mxu0 0.0
    %1393 = vmatpush1.xpose.msra.mxu0 0.0
    %1394 = vmatprep.subr.mxu0 0.0
    %1395 = vmatpush1.xpose.msra.mxu0 %v1362
    %1396 = vmatprep.subr.mxu0 0.0
    %1397 = vmatpush2.xpose.msra.mxu0 0.0
    %1398 = vmatprep.subr.mxu0 0.0
    %1399 = vmatpush2.xpose.msra.mxu0 0.0
    %1400 = vmatprep.subr.mxu0 0.0
    %1401 = vmatpush2.xpose.msra.mxu0 0.0
    %1402 = vmatprep.subr.mxu0 0.0
    %1403 = vmatpush2.xpose.msra.mxu0 0.0
    %1404 = vmatprep.subr.mxu0 0.0
    %1405 = vmatpush2.xpose.msra.mxu0 0.0
    %1406 = vmatprep.subr.mxu0 0.0
    %1407 = vmatpush2.xpose.msra.mxu0 0.0
    %1408 = vmatprep.subr.mxu0 0.0
    %1409 = vmatpush2.xpose.msra.mxu0 0.0
    %1410 = vmatprep.subr.mxu0 0.0
    %1411 = vmatpush2.xpose.msra.mxu0 0.0
    %1412 = vmatprep.subr.mxu0 0.0
    %1413 = vmatpush2.xpose.msra.mxu0 0.0
    %1414 = vmatprep.subr.mxu0 0.0
    %1415 = vmatpush2.xpose.msra.mxu0 0.0
    %1416 = vmatprep.subr.mxu0 0.0
    %1417 = vmatpush2.xpose.msra.mxu0 0.0
    %1418 = vmatprep.subr.mxu0 0.0
    %1419 = vmatpush2.xpose.msra.mxu0 0.0
    %1420 = vmatprep.subr.mxu0 0.0
    %1421 = vmatpush2.xpose.msra.mxu0 0.0
    %1422 = vmatprep.subr.mxu0 0.0
    %1423 = vmatpush2.xpose.msra.mxu0 0.0
    %1424 = vmatprep.subr.mxu0 0.0
    %1425 = vmatpush2.xpose.msra.mxu0 0.0
    %1426 = vmatprep.subr.mxu0 0.0
    %1427 = vmatpush2.xpose.msra.mxu0 0.0
    %1428 = vmatprep.mubr.f32.mxu0 0.0
    %1429 = vmatmul.mubr.f32.gmra.mxu0 %v1360
    %v1430 = vpop.f32.mrf.mxu0
    %v1431 = vadd.f32 0.0, %v1430
    %v1432 = vpop.f32.mrf.mxu0
    %1433 = vdwg.mxu0
    %1435 = vrot.lane.b32.xlu0 %v1354, 96
    %v1436 = vpop.permute.xlu0 %1435
    %v1437 = vsel %vm174, %v1354, 0
    %v1439 = vsel %vm174, %v1436, 0
    %1441 = vmatprep.subr.mxu0 0.0
    %1442 = vmatpush1.xpose.msra.mxu0 0.0
    %1443 = vmatprep.subr.mxu0 0.0
    %1444 = vmatpush1.xpose.msra.mxu0 0.0
    %1445 = vmatprep.subr.mxu0 0.0
    %1446 = vmatpush1.xpose.msra.mxu0 0.0
    %1447 = vmatprep.subr.mxu0 0.0
    %1448 = vmatpush1.xpose.msra.mxu0 0.0
    %1449 = vmatprep.subr.mxu0 0.0
    %1450 = vmatpush1.xpose.msra.mxu0 0.0
    %1451 = vmatprep.subr.mxu0 0.0
    %1452 = vmatpush1.xpose.msra.mxu0 0.0
    %1453 = vmatprep.subr.mxu0 0.0
    %1454 = vmatpush1.xpose.msra.mxu0 0.0
    %1455 = vmatprep.subr.mxu0 0.0
    %1456 = vmatpush1.xpose.msra.mxu0 0.0
    %1457 = vmatprep.subr.mxu0 0.0
    %1458 = vmatpush1.xpose.msra.mxu0 0.0
    %1459 = vmatprep.subr.mxu0 0.0
    %1460 = vmatpush1.xpose.msra.mxu0 0.0
    %1461 = vmatprep.subr.mxu0 0.0
    %1462 = vmatpush1.xpose.msra.mxu0 0.0
    %1463 = vmatprep.subr.mxu0 0.0
    %1464 = vmatpush1.xpose.msra.mxu0 0.0
    %1465 = vmatprep.subr.mxu0 0.0
    %1466 = vmatpush1.xpose.msra.mxu0 0.0
    %1467 = vmatprep.subr.mxu0 0.0
    %1468 = vmatpush1.xpose.msra.mxu0 0.0
    %1469 = vmatprep.subr.mxu0 0.0
    %1470 = vmatpush1.xpose.msra.mxu0 0.0
    %1471 = vmatprep.subr.mxu0 0.0
    %1472 = vmatpush1.xpose.msra.mxu0 %v1439
    %1473 = vmatprep.subr.mxu0 0.0
    %1474 = vmatpush2.xpose.msra.mxu0 0.0
    %1475 = vmatprep.subr.mxu0 0.0
    %1476 = vmatpush2.xpose.msra.mxu0 0.0
    %1477 = vmatprep.subr.mxu0 0.0
    %1478 = vmatpush2.xpose.msra.mxu0 0.0
    %1479 = vmatprep.subr.mxu0 0.0
    %1480 = vmatpush2.xpose.msra.mxu0 0.0
    %1481 = vmatprep.subr.mxu0 0.0
    %1482 = vmatpush2.xpose.msra.mxu0 0.0
    %1483 = vmatprep.subr.mxu0 0.0
    %1484 = vmatpush2.xpose.msra.mxu0 0.0
    %1485 = vmatprep.subr.mxu0 0.0
    %1486 = vmatpush2.xpose.msra.mxu0 0.0
    %1487 = vmatprep.subr.mxu0 0.0
    %1488 = vmatpush2.xpose.msra.mxu0 0.0
    %1489 = vmatprep.subr.mxu0 0.0
    %1490 = vmatpush2.xpose.msra.mxu0 0.0
    %1491 = vmatprep.subr.mxu0 0.0
    %1492 = vmatpush2.xpose.msra.mxu0 0.0
    %1493 = vmatprep.subr.mxu0 0.0
    %1494 = vmatpush2.xpose.msra.mxu0 0.0
    %1495 = vmatprep.subr.mxu0 0.0
    %1496 = vmatpush2.xpose.msra.mxu0 0.0
    %1497 = vmatprep.subr.mxu0 0.0
    %1498 = vmatpush2.xpose.msra.mxu0 0.0
    %1499 = vmatprep.subr.mxu0 0.0
    %1500 = vmatpush2.xpose.msra.mxu0 0.0
    %1501 = vmatprep.subr.mxu0 0.0
    %1502 = vmatpush2.xpose.msra.mxu0 0.0
    %1503 = vmatprep.subr.mxu0 0.0
    %1504 = vmatpush2.xpose.msra.mxu0 0.0
    %1505 = vmatprep.mubr.f32.mxu0 0.0
    %1506 = vmatmul.mubr.f32.gmra.mxu0 %v1437
    %v1507 = vpop.f32.mrf.mxu0
    %v1508 = vadd.f32 0.0, %v1507
    %v1509 = vpop.f32.mrf.mxu0
    %1510 = vdwg.mxu0
    %v1511 = vmul.f32 %v1431, 0.25
    %v1512 = vmul.f32 %v1508, 0.25
    %v1513 = vadd.f32 %v1511, %v354
    %v1514 = vadd.f32 %v1512, %v358
    %v1515 = vsel %vm363, %v1513, -inf
    %1516 = vmax.xlane.f32.xlu0 %v1515
    %v1517 = vpop.xlane.xlu0 %1516
    %v1518 = vsel %vm363, %v1514, -inf
    %1519 = vmax.xlane.f32.xlu0 %v1518
    %v1520 = vpop.xlane.xlu0 %1519
    %v1521 = vsub.f32 %v1513, %v1517
    %v1522 = vsub.f32 %v1514, %v1520
    %v1523 = vmul.f32 %v1521, 1.442695
    %v1524 = vpow.pop %v1523
    %v1525 = vmul.f32 %v1522, 1.442695
    %v1526 = vpow.pop %v1525
    %v1527 = vsel %vm363, %v1524, 0.0
    %1528 = vadd.xlane.f32.xlu0 %v1527
    %v1529 = vpop.xlane.xlu0 %1528
    %v1530 = vsel %vm363, %v1526, 0.0
    %1531 = vadd.xlane.f32.xlu0 %v1530
    %v1532 = vpop.xlane.xlu0 %1531
    %v1533 = vrcp.pop %v1529
    %v1534 = vrcp.pop %v1532
    %v1535 = vmul.f32 %v1524, %v1533
    %v1536 = vmul.f32 %v1526, %v1534
    %1537 = vrot.lane.b32.xlu0 %v1349, 64
    %v1538 = vpop.permute.xlu0 %1537
    %v1541 = vsel %vm363, %v1535, 0
    %1543 = vmatprep.subr.mxu0 0.0
    %1544 = vmatpush1.msra.mxu0 0.0
    %1545 = vmatprep.subr.mxu0 0.0
    %1546 = vmatpush1.msra.mxu0 0.0
    %1547 = vmatprep.subr.mxu0 0.0
    %1548 = vmatpush1.msra.mxu0 0.0
    %1549 = vmatprep.subr.mxu0 0.0
    %1550 = vmatpush1.msra.mxu0 0.0
    %1551 = vmatprep.subr.mxu0 0.0
    %1552 = vmatpush1.msra.mxu0 0.0
    %1553 = vmatprep.subr.mxu0 0.0
    %1554 = vmatpush1.msra.mxu0 0.0
    %1555 = vmatprep.subr.mxu0 0.0
    %1556 = vmatpush1.msra.mxu0 0.0
    %1557 = vmatprep.subr.mxu0 0.0
    %1558 = vmatpush1.msra.mxu0 0.0
    %1559 = vmatprep.subr.mxu0 0.0
    %1560 = vmatpush1.msra.mxu0 0.0
    %1561 = vmatprep.subr.mxu0 0.0
    %1562 = vmatpush1.msra.mxu0 0.0
    %1563 = vmatprep.subr.mxu0 0.0
    %1564 = vmatpush1.msra.mxu0 0.0
    %1565 = vmatprep.subr.mxu0 0.0
    %1566 = vmatpush1.msra.mxu0 0.0
    %1567 = vmatprep.subr.mxu0 0.0
    %1568 = vmatpush1.msra.mxu0 0.0
    %1569 = vmatprep.subr.mxu0 0.0
    %1570 = vmatpush1.msra.mxu0 0.0
    %1571 = vmatprep.subr.mxu0 0.0
    %1572 = vmatpush1.msra.mxu0 0.0
    %1573 = vmatprep.subr.mxu0 0.0
    %1574 = vmatpush1.msra.mxu0 %v1538
    %1575 = vmatprep.subr.mxu0 0.0
    %1576 = vmatpush2.msra.mxu0 0.0
    %1577 = vmatprep.subr.mxu0 0.0
    %1578 = vmatpush2.msra.mxu0 0.0
    %1579 = vmatprep.subr.mxu0 0.0
    %1580 = vmatpush2.msra.mxu0 0.0
    %1581 = vmatprep.subr.mxu0 0.0
    %1582 = vmatpush2.msra.mxu0 0.0
    %1583 = vmatprep.subr.mxu0 0.0
    %1584 = vmatpush2.msra.mxu0 0.0
    %1585 = vmatprep.subr.mxu0 0.0
    %1586 = vmatpush2.msra.mxu0 0.0
    %1587 = vmatprep.subr.mxu0 0.0
    %1588 = vmatpush2.msra.mxu0 0.0
    %1589 = vmatprep.subr.mxu0 0.0
    %1590 = vmatpush2.msra.mxu0 0.0
    %1591 = vmatprep.subr.mxu0 0.0
    %1592 = vmatpush2.msra.mxu0 0.0
    %1593 = vmatprep.subr.mxu0 0.0
    %1594 = vmatpush2.msra.mxu0 0.0
    %1595 = vmatprep.subr.mxu0 0.0
    %1596 = vmatpush2.msra.mxu0 0.0
    %1597 = vmatprep.subr.mxu0 0.0
    %1598 = vmatpush2.msra.mxu0 0.0
    %1599 = vmatprep.subr.mxu0 0.0
    %1600 = vmatpush2.msra.mxu0 0.0
    %1601 = vmatprep.subr.mxu0 0.0
    %1602 = vmatpush2.msra.mxu0 0.0
    %1603 = vmatprep.subr.mxu0 0.0
    %1604 = vmatpush2.msra.mxu0 0.0
    %1605 = vmatprep.subr.mxu0 0.0
    %1606 = vmatpush2.msra.mxu0 0.0
    %1607 = vmatprep.mubr.f32.mxu0 0.0
    %1608 = vmatmul.mubr.f32.gmra.mxu0 %v1541
    %v1609 = vpop.f32.mrf.mxu0
    %v1610 = vadd.f32 0.0, %v1609
    %v1611 = vpop.f32.mrf.mxu0
    %1612 = vdwg.mxu0
    %1613 = vrot.lane.b32.xlu0 %v1354, 64
    %v1614 = vpop.permute.xlu0 %1613
    %v1617 = vsel %vm363, %v1536, 0
    %1619 = vmatprep.subr.mxu0 0.0
    %1620 = vmatpush1.msra.mxu0 0.0
    %1621 = vmatprep.subr.mxu0 0.0
    %1622 = vmatpush1.msra.mxu0 0.0
    %1623 = vmatprep.subr.mxu0 0.0
    %1624 = vmatpush1.msra.mxu0 0.0
    %1625 = vmatprep.subr.mxu0 0.0
    %1626 = vmatpush1.msra.mxu0 0.0
    %1627 = vmatprep.subr.mxu0 0.0
    %1628 = vmatpush1.msra.mxu0 0.0
    %1629 = vmatprep.subr.mxu0 0.0
    %1630 = vmatpush1.msra.mxu0 0.0
    %1631 = vmatprep.subr.mxu0 0.0
    %1632 = vmatpush1.msra.mxu0 0.0
    %1633 = vmatprep.subr.mxu0 0.0
    %1634 = vmatpush1.msra.mxu0 0.0
    %1635 = vmatprep.subr.mxu0 0.0
    %1636 = vmatpush1.msra.mxu0 0.0
    %1637 = vmatprep.subr.mxu0 0.0
    %1638 = vmatpush1.msra.mxu0 0.0
    %1639 = vmatprep.subr.mxu0 0.0
    %1640 = vmatpush1.msra.mxu0 0.0
    %1641 = vmatprep.subr.mxu0 0.0
    %1642 = vmatpush1.msra.mxu0 0.0
    %1643 = vmatprep.subr.mxu0 0.0
    %1644 = vmatpush1.msra.mxu0 0.0
    %1645 = vmatprep.subr.mxu0 0.0
    %1646 = vmatpush1.msra.mxu0 0.0
    %1647 = vmatprep.subr.mxu0 0.0
    %1648 = vmatpush1.msra.mxu0 0.0
    %1649 = vmatprep.subr.mxu0 0.0
    %1650 = vmatpush1.msra.mxu0 %v1614
    %1651 = vmatprep.subr.mxu0 0.0
    %1652 = vmatpush2.msra.mxu0 0.0
    %1653 = vmatprep.subr.mxu0 0.0
    %1654 = vmatpush2.msra.mxu0 0.0
    %1655 = vmatprep.subr.mxu0 0.0
    %1656 = vmatpush2.msra.mxu0 0.0
    %1657 = vmatprep.subr.mxu0 0.0
    %1658 = vmatpush2.msra.mxu0 0.0
    %1659 = vmatprep.subr.mxu0 0.0
    %1660 = vmatpush2.msra.mxu0 0.0
    %1661 = vmatprep.subr.mxu0 0.0
    %1662 = vmatpush2.msra.mxu0 0.0
    %1663 = vmatprep.subr.mxu0 0.0
    %1664 = vmatpush2.msra.mxu0 0.0
    %1665 = vmatprep.subr.mxu0 0.0
    %1666 = vmatpush2.msra.mxu0 0.0
    %1667 = vmatprep.subr.mxu0 0.0
    %1668 = vmatpush2.msra.mxu0 0.0
    %1669 = vmatprep.subr.mxu0 0.0
    %1670 = vmatpush2.msra.mxu0 0.0
    %1671 = vmatprep.subr.mxu0 0.0
    %1672 = vmatpush2.msra.mxu0 0.0
    %1673 = vmatprep.subr.mxu0 0.0
    %1674 = vmatpush2.msra.mxu0 0.0
    %1675 = vmatprep.subr.mxu0 0.0
    %1676 = vmatpush2.msra.mxu0 0.0
    %1677 = vmatprep.subr.mxu0 0.0
    %1678 = vmatpush2.msra.mxu0 0.0
    %1679 = vmatprep.subr.mxu0 0.0
    %1680 = vmatpush2.msra.mxu0 0.0
    %1681 = vmatprep.subr.mxu0 0.0
    %1682 = vmatpush2.msra.mxu0 0.0
    %1683 = vmatprep.mubr.f32.mxu0 0.0
    %1684 = vmatmul.mubr.f32.gmra.mxu0 %v1617
    %v1685 = vpop.f32.mrf.mxu0
    %v1686 = vadd.f32 0.0, %v1685
    %v1687 = vpop.f32.mrf.mxu0
    %1688 = vdwg.mxu0
    %1689 = vrot.lane.b32.xlu0 %v1349, 112
    %v1690 = vpop.permute.xlu0 %1689
    %1691 = vrot.lane.b32.xlu0 %v1349, 80
    %v1692 = vpop.permute.xlu0 %1691
    %v1693 = vsel %vm174, %v1690, 0
    %v1695 = vsel %vm174, %v1692, 0
    %1697 = vmatprep.subr.mxu0 0.0
    %1698 = vmatpush1.xpose.msra.mxu0 0.0
    %1699 = vmatprep.subr.mxu0 0.0
    %1700 = vmatpush1.xpose.msra.mxu0 0.0
    %1701 = vmatprep.subr.mxu0 0.0
    %1702 = vmatpush1.xpose.msra.mxu0 0.0
    %1703 = vmatprep.subr.mxu0 0.0
    %1704 = vmatpush1.xpose.msra.mxu0 0.0
    %1705 = vmatprep.subr.mxu0 0.0
    %1706 = vmatpush1.xpose.msra.mxu0 0.0
    %1707 = vmatprep.subr.mxu0 0.0
    %1708 = vmatpush1.xpose.msra.mxu0 0.0
    %1709 = vmatprep.subr.mxu0 0.0
    %1710 = vmatpush1.xpose.msra.mxu0 0.0
    %1711 = vmatprep.subr.mxu0 0.0
    %1712 = vmatpush1.xpose.msra.mxu0 0.0
    %1713 = vmatprep.subr.mxu0 0.0
    %1714 = vmatpush1.xpose.msra.mxu0 0.0
    %1715 = vmatprep.subr.mxu0 0.0
    %1716 = vmatpush1.xpose.msra.mxu0 0.0
    %1717 = vmatprep.subr.mxu0 0.0
    %1718 = vmatpush1.xpose.msra.mxu0 0.0
    %1719 = vmatprep.subr.mxu0 0.0
    %1720 = vmatpush1.xpose.msra.mxu0 0.0
    %1721 = vmatprep.subr.mxu0 0.0
    %1722 = vmatpush1.xpose.msra.mxu0 0.0
    %1723 = vmatprep.subr.mxu0 0.0
    %1724 = vmatpush1.xpose.msra.mxu0 0.0
    %1725 = vmatprep.subr.mxu0 0.0
    %1726 = vmatpush1.xpose.msra.mxu0 0.0
    %1727 = vmatprep.subr.mxu0 0.0
    %1728 = vmatpush1.xpose.msra.mxu0 %v1695
    %1729 = vmatprep.subr.mxu0 0.0
    %1730 = vmatpush2.xpose.msra.mxu0 0.0
    %1731 = vmatprep.subr.mxu0 0.0
    %1732 = vmatpush2.xpose.msra.mxu0 0.0
    %1733 = vmatprep.subr.mxu0 0.0
    %1734 = vmatpush2.xpose.msra.mxu0 0.0
    %1735 = vmatprep.subr.mxu0 0.0
    %1736 = vmatpush2.xpose.msra.mxu0 0.0
    %1737 = vmatprep.subr.mxu0 0.0
    %1738 = vmatpush2.xpose.msra.mxu0 0.0
    %1739 = vmatprep.subr.mxu0 0.0
    %1740 = vmatpush2.xpose.msra.mxu0 0.0
    %1741 = vmatprep.subr.mxu0 0.0
    %1742 = vmatpush2.xpose.msra.mxu0 0.0
    %1743 = vmatprep.subr.mxu0 0.0
    %1744 = vmatpush2.xpose.msra.mxu0 0.0
    %1745 = vmatprep.subr.mxu0 0.0
    %1746 = vmatpush2.xpose.msra.mxu0 0.0
    %1747 = vmatprep.subr.mxu0 0.0
    %1748 = vmatpush2.xpose.msra.mxu0 0.0
    %1749 = vmatprep.subr.mxu0 0.0
    %1750 = vmatpush2.xpose.msra.mxu0 0.0
    %1751 = vmatprep.subr.mxu0 0.0
    %1752 = vmatpush2.xpose.msra.mxu0 0.0
    %1753 = vmatprep.subr.mxu0 0.0
    %1754 = vmatpush2.xpose.msra.mxu0 0.0
    %1755 = vmatprep.subr.mxu0 0.0
    %1756 = vmatpush2.xpose.msra.mxu0 0.0
    %1757 = vmatprep.subr.mxu0 0.0
    %1758 = vmatpush2.xpose.msra.mxu0 0.0
    %1759 = vmatprep.subr.mxu0 0.0
    %1760 = vmatpush2.xpose.msra.mxu0 0.0
    %1761 = vmatprep.mubr.f32.mxu0 0.0
    %1762 = vmatmul.mubr.f32.gmra.mxu0 %v1693
    %v1763 = vpop.f32.mrf.mxu0
    %v1764 = vadd.f32 0.0, %v1763
    %v1765 = vpop.f32.mrf.mxu0
    %1766 = vdwg.mxu0
    %1767 = vrot.lane.b32.xlu0 %v1354, 112
    %v1768 = vpop.permute.xlu0 %1767
    %1769 = vrot.lane.b32.xlu0 %v1354, 80
    %v1770 = vpop.permute.xlu0 %1769
    %v1771 = vsel %vm174, %v1768, 0
    %v1773 = vsel %vm174, %v1770, 0
    %1775 = vmatprep.subr.mxu0 0.0
    %1776 = vmatpush1.xpose.msra.mxu0 0.0
    %1777 = vmatprep.subr.mxu0 0.0
    %1778 = vmatpush1.xpose.msra.mxu0 0.0
    %1779 = vmatprep.subr.mxu0 0.0
    %1780 = vmatpush1.xpose.msra.mxu0 0.0
    %1781 = vmatprep.subr.mxu0 0.0
    %1782 = vmatpush1.xpose.msra.mxu0 0.0
    %1783 = vmatprep.subr.mxu0 0.0
    %1784 = vmatpush1.xpose.msra.mxu0 0.0
    %1785 = vmatprep.subr.mxu0 0.0
    %1786 = vmatpush1.xpose.msra.mxu0 0.0
    %1787 = vmatprep.subr.mxu0 0.0
    %1788 = vmatpush1.xpose.msra.mxu0 0.0
    %1789 = vmatprep.subr.mxu0 0.0
    %1790 = vmatpush1.xpose.msra.mxu0 0.0
    %1791 = vmatprep.subr.mxu0 0.0
    %1792 = vmatpush1.xpose.msra.mxu0 0.0
    %1793 = vmatprep.subr.mxu0 0.0
    %1794 = vmatpush1.xpose.msra.mxu0 0.0
    %1795 = vmatprep.subr.mxu0 0.0
    %1796 = vmatpush1.xpose.msra.mxu0 0.0
    %1797 = vmatprep.subr.mxu0 0.0
    %1798 = vmatpush1.xpose.msra.mxu0 0.0
    %1799 = vmatprep.subr.mxu0 0.0
    %1800 = vmatpush1.xpose.msra.mxu0 0.0
    %1801 = vmatprep.subr.mxu0 0.0
    %1802 = vmatpush1.xpose.msra.mxu0 0.0
    %1803 = vmatprep.subr.mxu0 0.0
    %1804 = vmatpush1.xpose.msra.mxu0 0.0
    %1805 = vmatprep.subr.mxu0 0.0
    %1806 = vmatpush1.xpose.msra.mxu0 %v1773
    %1807 = vmatprep.subr.mxu0 0.0
    %1808 = vmatpush2.xpose.msra.mxu0 0.0
    %1809 = vmatprep.subr.mxu0 0.0
    %1810 = vmatpush2.xpose.msra.mxu0 0.0
    %1811 = vmatprep.subr.mxu0 0.0
    %1812 = vmatpush2.xpose.msra.mxu0 0.0
    %1813 = vmatprep.subr.mxu0 0.0
    %1814 = vmatpush2.xpose.msra.mxu0 0.0
    %1815 = vmatprep.subr.mxu0 0.0
    %1816 = vmatpush2.xpose.msra.mxu0 0.0
    %1817 = vmatprep.subr.mxu0 0.0
    %1818 = vmatpush2.xpose.msra.mxu0 0.0
    %1819 = vmatprep.subr.mxu0 0.0
    %1820 = vmatpush2.xpose.msra.mxu0 0.0
    %1821 = vmatprep.subr.mxu0 0.0
    %1822 = vmatpush2.xpose.msra.mxu0 0.0
    %1823 = vmatprep.subr.mxu0 0.0
    %1824 = vmatpush2.xpose.msra.mxu0 0.0
    %1825 = vmatprep.subr.mxu0 0.0
    %1826 = vmatpush2.xpose.msra.mxu0 0.0
    %1827 = vmatprep.subr.mxu0 0.0
    %1828 = vmatpush2.xpose.msra.mxu0 0.0
    %1829 = vmatprep.subr.mxu0 0.0
    %1830 = vmatpush2.xpose.msra.mxu0 0.0
    %1831 = vmatprep.subr.mxu0 0.0
    %1832 = vmatpush2.xpose.msra.mxu0 0.0
    %1833 = vmatprep.subr.mxu0 0.0
    %1834 = vmatpush2.xpose.msra.mxu0 0.0
    %1835 = vmatprep.subr.mxu0 0.0
    %1836 = vmatpush2.xpose.msra.mxu0 0.0
    %1837 = vmatprep.subr.mxu0 0.0
    %1838 = vmatpush2.xpose.msra.mxu0 0.0
    %1839 = vmatprep.mubr.f32.mxu0 0.0
    %1840 = vmatmul.mubr.f32.gmra.mxu0 %v1771
    %v1841 = vpop.f32.mrf.mxu0
    %v1842 = vadd.f32 0.0, %v1841
    %v1843 = vpop.f32.mrf.mxu0
    %1844 = vdwg.mxu0
    %v1845 = vmul.f32 %v1764, 0.25
    %v1846 = vmul.f32 %v1842, 0.25
    %v1847 = vadd.f32 %v1845, %v354
    %v1848 = vadd.f32 %v1846, %v358
    %v1849 = vsel %vm363, %v1847, -inf
    %1850 = vmax.xlane.f32.xlu0 %v1849
    %v1851 = vpop.xlane.xlu0 %1850
    %v1852 = vsel %vm363, %v1848, -inf
    %1853 = vmax.xlane.f32.xlu0 %v1852
    %v1854 = vpop.xlane.xlu0 %1853
    %v1855 = vsub.f32 %v1847, %v1851
    %v1856 = vsub.f32 %v1848, %v1854
    %v1857 = vmul.f32 %v1855, 1.442695
    %v1858 = vpow.pop %v1857
    %v1859 = vmul.f32 %v1856, 1.442695
    %v1860 = vpow.pop %v1859
    %v1861 = vsel %vm363, %v1858, 0.0
    %1862 = vadd.xlane.f32.xlu0 %v1861
    %v1863 = vpop.xlane.xlu0 %1862
    %v1864 = vsel %vm363, %v1860, 0.0
    %1865 = vadd.xlane.f32.xlu0 %v1864
    %v1866 = vpop.xlane.xlu0 %1865
    %v1867 = vrcp.pop %v1863
    %v1868 = vrcp.pop %v1866
    %v1869 = vmul.f32 %v1858, %v1867
    %v1870 = vmul.f32 %v1860, %v1868
    %1871 = vrot.lane.b32.xlu0 %v1349, 48
    %v1872 = vpop.permute.xlu0 %1871
    %v1875 = vsel %vm363, %v1869, 0
    %1877 = vmatprep.subr.mxu0 0.0
    %1878 = vmatpush1.msra.mxu0 0.0
    %1879 = vmatprep.subr.mxu0 0.0
    %1880 = vmatpush1.msra.mxu0 0.0
    %1881 = vmatprep.subr.mxu0 0.0
    %1882 = vmatpush1.msra.mxu0 0.0
    %1883 = vmatprep.subr.mxu0 0.0
    %1884 = vmatpush1.msra.mxu0 0.0
    %1885 = vmatprep.subr.mxu0 0.0
    %1886 = vmatpush1.msra.mxu0 0.0
    %1887 = vmatprep.subr.mxu0 0.0
    %1888 = vmatpush1.msra.mxu0 0.0
    %1889 = vmatprep.subr.mxu0 0.0
    %1890 = vmatpush1.msra.mxu0 0.0
    %1891 = vmatprep.subr.mxu0 0.0
    %1892 = vmatpush1.msra.mxu0 0.0
    %1893 = vmatprep.subr.mxu0 0.0
    %1894 = vmatpush1.msra.mxu0 0.0
    %1895 = vmatprep.subr.mxu0 0.0
    %1896 = vmatpush1.msra.mxu0 0.0
    %1897 = vmatprep.subr.mxu0 0.0
    %1898 = vmatpush1.msra.mxu0 0.0
    %1899 = vmatprep.subr.mxu0 0.0
    %1900 = vmatpush1.msra.mxu0 0.0
    %1901 = vmatprep.subr.mxu0 0.0
    %1902 = vmatpush1.msra.mxu0 0.0
    %1903 = vmatprep.subr.mxu0 0.0
    %1904 = vmatpush1.msra.mxu0 0.0
    %1905 = vmatprep.subr.mxu0 0.0
    %1906 = vmatpush1.msra.mxu0 0.0
    %1907 = vmatprep.subr.mxu0 0.0
    %1908 = vmatpush1.msra.mxu0 %v1872
    %1909 = vmatprep.subr.mxu0 0.0
    %1910 = vmatpush2.msra.mxu0 0.0
    %1911 = vmatprep.subr.mxu0 0.0
    %1912 = vmatpush2.msra.mxu0 0.0
    %1913 = vmatprep.subr.mxu0 0.0
    %1914 = vmatpush2.msra.mxu0 0.0
    %1915 = vmatprep.subr.mxu0 0.0
    %1916 = vmatpush2.msra.mxu0 0.0
    %1917 = vmatprep.subr.mxu0 0.0
    %1918 = vmatpush2.msra.mxu0 0.0
    %1919 = vmatprep.subr.mxu0 0.0
    %1920 = vmatpush2.msra.mxu0 0.0
    %1921 = vmatprep.subr.mxu0 0.0
    %1922 = vmatpush2.msra.mxu0 0.0
    %1923 = vmatprep.subr.mxu0 0.0
    %1924 = vmatpush2.msra.mxu0 0.0
    %1925 = vmatprep.subr.mxu0 0.0
    %1926 = vmatpush2.msra.mxu0 0.0
    %1927 = vmatprep.subr.mxu0 0.0
    %1928 = vmatpush2.msra.mxu0 0.0
    %1929 = vmatprep.subr.mxu0 0.0
    %1930 = vmatpush2.msra.mxu0 0.0
    %1931 = vmatprep.subr.mxu0 0.0
    %1932 = vmatpush2.msra.mxu0 0.0
    %1933 = vmatprep.subr.mxu0 0.0
    %1934 = vmatpush2.msra.mxu0 0.0
    %1935 = vmatprep.subr.mxu0 0.0
    %1936 = vmatpush2.msra.mxu0 0.0
    %1937 = vmatprep.subr.mxu0 0.0
    %1938 = vmatpush2.msra.mxu0 0.0
    %1939 = vmatprep.subr.mxu0 0.0
    %1940 = vmatpush2.msra.mxu0 0.0
    %1941 = vmatprep.mubr.f32.mxu0 0.0
    %1942 = vmatmul.mubr.f32.gmra.mxu0 %v1875
    %v1943 = vpop.f32.mrf.mxu0
    %v1944 = vadd.f32 0.0, %v1943
    %v1945 = vpop.f32.mrf.mxu0
    %1946 = vdwg.mxu0
    %1947 = vrot.lane.b32.xlu0 %v1354, 48
    %v1948 = vpop.permute.xlu0 %1947
    %v1951 = vsel %vm363, %v1870, 0
    %1953 = vmatprep.subr.mxu0 0.0
    %1954 = vmatpush1.msra.mxu0 0.0
    %1955 = vmatprep.subr.mxu0 0.0
    %1956 = vmatpush1.msra.mxu0 0.0
    %1957 = vmatprep.subr.mxu0 0.0
    %1958 = vmatpush1.msra.mxu0 0.0
    %1959 = vmatprep.subr.mxu0 0.0
    %1960 = vmatpush1.msra.mxu0 0.0
    %1961 = vmatprep.subr.mxu0 0.0
    %1962 = vmatpush1.msra.mxu0 0.0
    %1963 = vmatprep.subr.mxu0 0.0
    %1964 = vmatpush1.msra.mxu0 0.0
    %1965 = vmatprep.subr.mxu0 0.0
    %1966 = vmatpush1.msra.mxu0 0.0
    %1967 = vmatprep.subr.mxu0 0.0
    %1968 = vmatpush1.msra.mxu0 0.0
    %1969 = vmatprep.subr.mxu0 0.0
    %1970 = vmatpush1.msra.mxu0 0.0
    %1971 = vmatprep.subr.mxu0 0.0
    %1972 = vmatpush1.msra.mxu0 0.0
    %1973 = vmatprep.subr.mxu0 0.0
    %1974 = vmatpush1.msra.mxu0 0.0
    %1975 = vmatprep.subr.mxu0 0.0
    %1976 = vmatpush1.msra.mxu0 0.0
    %1977 = vmatprep.subr.mxu0 0.0
    %1978 = vmatpush1.msra.mxu0 0.0
    %1979 = vmatprep.subr.mxu0 0.0
    %1980 = vmatpush1.msra.mxu0 0.0
    %1981 = vmatprep.subr.mxu0 0.0
    %1982 = vmatpush1.msra.mxu0 0.0
    %1983 = vmatprep.subr.mxu0 0.0
    %1984 = vmatpush1.msra.mxu0 %v1948
    %1985 = vmatprep.subr.mxu0 0.0
    %1986 = vmatpush2.msra.mxu0 0.0
    %1987 = vmatprep.subr.mxu0 0.0
    %1988 = vmatpush2.msra.mxu0 0.0
    %1989 = vmatprep.subr.mxu0 0.0
    %1990 = vmatpush2.msra.mxu0 0.0
    %1991 = vmatprep.subr.mxu0 0.0
    %1992 = vmatpush2.msra.mxu0 0.0
    %1993 = vmatprep.subr.mxu0 0.0
    %1994 = vmatpush2.msra.mxu0 0.0
    %1995 = vmatprep.subr.mxu0 0.0
    %1996 = vmatpush2.msra.mxu0 0.0
    %1997 = vmatprep.subr.mxu0 0.0
    %1998 = vmatpush2.msra.mxu0 0.0
    %1999 = vmatprep.subr.mxu0 0.0
    %2000 = vmatpush2.msra.mxu0 0.0
    %2001 = vmatprep.subr.mxu0 0.0
    %2002 = vmatpush2.msra.mxu0 0.0
    %2003 = vmatprep.subr.mxu0 0.0
    %2004 = vmatpush2.msra.mxu0 0.0
    %2005 = vmatprep.subr.mxu0 0.0
    %2006 = vmatpush2.msra.mxu0 0.0
    %2007 = vmatprep.subr.mxu0 0.0
    %2008 = vmatpush2.msra.mxu0 0.0
    %2009 = vmatprep.subr.mxu0 0.0
    %2010 = vmatpush2.msra.mxu0 0.0
    %2011 = vmatprep.subr.mxu0 0.0
    %2012 = vmatpush2.msra.mxu0 0.0
    %2013 = vmatprep.subr.mxu0 0.0
    %2014 = vmatpush2.msra.mxu0 0.0
    %2015 = vmatprep.subr.mxu0 0.0
    %2016 = vmatpush2.msra.mxu0 0.0
    %2017 = vmatprep.mubr.f32.mxu0 0.0
    %2018 = vmatmul.mubr.f32.gmra.mxu0 %v1951
    %v2019 = vpop.f32.mrf.mxu0
    %v2020 = vadd.f32 0.0, %v2019
    %v2021 = vpop.f32.mrf.mxu0
    %2022 = vdwg.mxu0
    %2025 = vrot.lane.b32.xlu0 %v1944, 16
    %v2026 = vpop.permute.xlu0 %2025
    %2027 = vrot.lane.b32.xlu0 %v2020, 16
    %v2028 = vpop.permute.xlu0 %2027
    %v2031 = vsel %vm174, %v1610, %v2026
    %v2032 = vsel %vm174, %v1686, %v2028
    %v2033 = vlaneseq
    %v2034 = vshrl.u32 %v2033, 7
    %v2035 = vsub.s32 1, %v2034
    %v2036 = vrot.slane %v1271, %v2035
    %2041 = vrot.lane.b32.xlu0 %v1253, 32
    %v2042 = vpop.permute.xlu0 %2041
    %2043 = vrot.lane.b32.xlu0 %v1255, 32
    %v2044 = vpop.permute.xlu0 %2043
    %2045 = vrot.lane.b32.xlu0 %v1257, 32
    %v2046 = vpop.permute.xlu0 %2045
    %2047 = vrot.lane.b32.xlu0 %v1259, 32
    %v2048 = vpop.permute.xlu0 %2047
    %v2054 = vsel %vm29, %v2031, 0
    %v2057 = vsel %vm29, %v2032, 0
    %2059 = vmatprep.subr.mxu0 0.0
    %2060 = vmatpush1.msra.mxu0 0.0
    %2061 = vmatprep.subr.mxu0 0.0
    %2062 = vmatpush1.msra.mxu0 0.0
    %2063 = vmatprep.subr.mxu0 0.0
    %2064 = vmatpush1.msra.mxu0 0.0
    %2065 = vmatprep.subr.mxu0 0.0
    %2066 = vmatpush1.msra.mxu0 0.0
    %2067 = vmatprep.subr.mxu0 0.0
    %2068 = vmatpush1.msra.mxu0 0.0
    %2069 = vmatprep.subr.mxu0 0.0
    %2070 = vmatpush1.msra.mxu0 0.0
    %2071 = vmatprep.subr.mxu0 0.0
    %2072 = vmatpush1.msra.mxu0 0.0
    %2073 = vmatprep.subr.mxu0 0.0
    %2074 = vmatpush1.msra.mxu0 0.0
    %2075 = vmatprep.subr.mxu0 0.0
    %2076 = vmatpush1.msra.mxu0 0.0
    %2077 = vmatprep.subr.mxu0 0.0
    %2078 = vmatpush1.msra.mxu0 0.0
    %2079 = vmatprep.subr.mxu0 0.0
    %2080 = vmatpush1.msra.mxu0 0.0
    %2081 = vmatprep.subr.mxu0 0.0
    %2082 = vmatpush1.msra.mxu0 0.0
    %2083 = vmatprep.subr.mxu0 0.0
    %2084 = vmatpush1.msra.mxu0 %v2048
    %2085 = vmatprep.subr.mxu0 0.0
    %2086 = vmatpush1.msra.mxu0 %v2046
    %2087 = vmatprep.subr.mxu0 0.0
    %2088 = vmatpush1.msra.mxu0 %v2044
    %2089 = vmatprep.subr.mxu0 0.0
    %2090 = vmatpush1.msra.mxu0 %v2042
    %2091 = vmatprep.subr.mxu0 0.0
    %2092 = vmatpush2.msra.mxu0 0.0
    %2093 = vmatprep.subr.mxu0 0.0
    %2094 = vmatpush2.msra.mxu0 0.0
    %2095 = vmatprep.subr.mxu0 0.0
    %2096 = vmatpush2.msra.mxu0 0.0
    %2097 = vmatprep.subr.mxu0 0.0
    %2098 = vmatpush2.msra.mxu0 0.0
    %2099 = vmatprep.subr.mxu0 0.0
    %2100 = vmatpush2.msra.mxu0 0.0
    %2101 = vmatprep.subr.mxu0 0.0
    %2102 = vmatpush2.msra.mxu0 0.0
    %2103 = vmatprep.subr.mxu0 0.0
    %2104 = vmatpush2.msra.mxu0 0.0
    %2105 = vmatprep.subr.mxu0 0.0
    %2106 = vmatpush2.msra.mxu0 0.0
    %2107 = vmatprep.subr.mxu0 0.0
    %2108 = vmatpush2.msra.mxu0 0.0
    %2109 = vmatprep.subr.mxu0 0.0
    %2110 = vmatpush2.msra.mxu0 0.0
    %2111 = vmatprep.subr.mxu0 0.0
    %2112 = vmatpush2.msra.mxu0 0.0
    %2113 = vmatprep.subr.mxu0 0.0
    %2114 = vmatpush2.msra.mxu0 0.0
    %2115 = vmatprep.subr.mxu0 0.0
    %2116 = vmatpush2.msra.mxu0 0.0
    %2117 = vmatprep.subr.mxu0 0.0
    %2118 = vmatpush2.msra.mxu0 0.0
    %2119 = vmatprep.subr.mxu0 0.0
    %2120 = vmatpush2.msra.mxu0 0.0
    %2121 = vmatprep.subr.mxu0 0.0
    %2122 = vmatpush2.msra.mxu0 0.0
    %2123 = vmatprep.mubr.f32.mxu0 0.0
    %2124 = vmatmul.mubr.f32.gmra.mxu0 %v2054
    %v2125 = vpop.f32.mrf.mxu0
    %v2126 = vadd.f32 %v2036, %v2125
    %v2127 = vpop.f32.mrf.mxu0
    %2128 = vmatprep.mubr.f32.mxu0 0.0
    %2129 = vmatmul.mubr.f32.gmra.mxu0 %v2057
    %v2130 = vpop.f32.mrf.mxu0
    %v2131 = vadd.f32 %v2036, %v2130
    %v2132 = vpop.f32.mrf.mxu0
    %2133 = vdwg.mxu0
    %v2134 = vadd.f32 %v1250, %v2126
    %v2135 = vadd.f32 %v1251, %v2131
    %v2136 = vsel %vm29, %v2134, 0.0
    %2137 = vadd.xlane.f32.xlu0 %v2136
    %v2138 = vpop.xlane.xlu0 %2137
    %v2139 = vsel %vm29, %v2135, 0.0
    %2140 = vadd.xlane.f32.xlu0 %v2139
    %v2141 = vpop.xlane.xlu0 %2140
    %v2142 = vmul.f32 %v2138, %v36
    %v2143 = vmul.f32 %v2141, %v36
    %v2144 = vsub.f32 %v2134, %v2142
    %v2145 = vsub.f32 %v2135, %v2143
    %v2146 = vmul.f32 %v2144, %v2144
    %v2147 = vmul.f32 %v2145, %v2145
    %v2148 = vsel %vm29, %v2146, 0.0
    %2149 = vadd.xlane.f32.xlu0 %v2148
    %v2150 = vpop.xlane.xlu0 %2149
    %v2151 = vsel %vm29, %v2147, 0.0
    %2152 = vadd.xlane.f32.xlu0 %v2151
    %v2153 = vpop.xlane.xlu0 %2152
    %v2154 = vmul.f32 %v2150, %v36
    %v2155 = vmul.f32 %v2153, %v36
    %v2156 = vadd.f32 %v2154, 1e-12
    %v2157 = vadd.f32 %v2155, 1e-12
    %v2158 = vrsqrt.pop %v2156
    %v2159 = vrsqrt.pop %v2157
    %v2160 = vmul.f32 %v2144, %v2158
    %v2161 = vmul.f32 %v2145, %v2159
    %v2162 = vlaneseq
    %v2163 = vshrl.u32 %v2162, 7
    %v2164 = vsub.s32 4, %v2163
    %v2165 = vrot.slane %v1271, %v2164
    %v2166 = vmul.f32 %v2160, %v2165
    %v2167 = vmul.f32 %v2161, %v2165
    %v2168 = vlaneseq
    %v2169 = vshrl.u32 %v2168, 7
    %v2170 = vsub.s32 5, %v2169
    %v2171 = vrot.slane %v1271, %v2170
    %v2172 = vadd.f32 %v2166, %v2171
    %v2173 = vadd.f32 %v2167, %v2171
    %v2174 = vlaneseq
    %v2175 = vshrl.u32 %v2174, 7
    %v2176 = vsub.s32 2, %v2175
    %v2177 = vrot.slane %v1271, %v2176
    %v2179 = vsel %vm29, %v2172, 0
    %v2182 = vsel %vm29, %v2173, 0
    %2184 = vmatprep.subr.mxu0 0.0
    %2185 = vmatpush1.msra.mxu0 0.0
    %2186 = vmatprep.subr.mxu0 0.0
    %2187 = vmatpush1.msra.mxu0 0.0
    %2188 = vmatprep.subr.mxu0 0.0
    %2189 = vmatpush1.msra.mxu0 0.0
    %2190 = vmatprep.subr.mxu0 0.0
    %2191 = vmatpush1.msra.mxu0 0.0
    %2192 = vmatprep.subr.mxu0 0.0
    %2193 = vmatpush1.msra.mxu0 0.0
    %2194 = vmatprep.subr.mxu0 0.0
    %2195 = vmatpush1.msra.mxu0 0.0
    %2196 = vmatprep.subr.mxu0 0.0
    %2197 = vmatpush1.msra.mxu0 0.0
    %2198 = vmatprep.subr.mxu0 0.0
    %2199 = vmatpush1.msra.mxu0 0.0
    %2200 = vmatprep.subr.mxu0 0.0
    %2201 = vmatpush1.msra.mxu0 0.0
    %2202 = vmatprep.subr.mxu0 0.0
    %2203 = vmatpush1.msra.mxu0 0.0
    %2204 = vmatprep.subr.mxu0 0.0
    %2205 = vmatpush1.msra.mxu0 0.0
    %2206 = vmatprep.subr.mxu0 0.0
    %2207 = vmatpush1.msra.mxu0 0.0
    %2208 = vmatprep.subr.mxu0 0.0
    %2209 = vmatpush1.msra.mxu0 %v1260
    %2210 = vmatprep.subr.mxu0 0.0
    %2211 = vmatpush1.msra.mxu0 %v1258
    %2212 = vmatprep.subr.mxu0 0.0
    %2213 = vmatpush1.msra.mxu0 %v1256
    %2214 = vmatprep.subr.mxu0 0.0
    %2215 = vmatpush1.msra.mxu0 %v1254
    %2216 = vmatprep.subr.mxu0 0.0
    %2217 = vmatpush2.msra.mxu0 0.0
    %2218 = vmatprep.subr.mxu0 0.0
    %2219 = vmatpush2.msra.mxu0 0.0
    %2220 = vmatprep.subr.mxu0 0.0
    %2221 = vmatpush2.msra.mxu0 0.0
    %2222 = vmatprep.subr.mxu0 0.0
    %2223 = vmatpush2.msra.mxu0 0.0
    %2224 = vmatprep.subr.mxu0 0.0
    %2225 = vmatpush2.msra.mxu0 0.0
    %2226 = vmatprep.subr.mxu0 0.0
    %2227 = vmatpush2.msra.mxu0 0.0
    %2228 = vmatprep.subr.mxu0 0.0
    %2229 = vmatpush2.msra.mxu0 0.0
    %2230 = vmatprep.subr.mxu0 0.0
    %2231 = vmatpush2.msra.mxu0 0.0
    %2232 = vmatprep.subr.mxu0 0.0
    %2233 = vmatpush2.msra.mxu0 0.0
    %2234 = vmatprep.subr.mxu0 0.0
    %2235 = vmatpush2.msra.mxu0 0.0
    %2236 = vmatprep.subr.mxu0 0.0
    %2237 = vmatpush2.msra.mxu0 0.0
    %2238 = vmatprep.subr.mxu0 0.0
    %2239 = vmatpush2.msra.mxu0 0.0
    %2240 = vmatprep.subr.mxu0 0.0
    %2241 = vmatpush2.msra.mxu0 0.0
    %2242 = vmatprep.subr.mxu0 0.0
    %2243 = vmatpush2.msra.mxu0 0.0
    %2244 = vmatprep.subr.mxu0 0.0
    %2245 = vmatpush2.msra.mxu0 0.0
    %2246 = vmatprep.subr.mxu0 0.0
    %2247 = vmatpush2.msra.mxu0 0.0
    %2248 = vmatprep.mubr.f32.mxu0 0.0
    %2249 = vmatmul.mubr.f32.gmra.mxu0 %v2179
    %v2250 = vpop.f32.mrf.mxu0
    %v2251 = vadd.f32 %v2177, %v2250
    %v2252 = vpop.f32.mrf.mxu0
    %2253 = vmatprep.mubr.f32.mxu0 0.0
    %2254 = vmatmul.mubr.f32.gmra.mxu0 %v2182
    %v2255 = vpop.f32.mrf.mxu0
    %v2256 = vadd.f32 %v2177, %v2255
    %v2257 = vpop.f32.mrf.mxu0
    %2258 = vdwg.mxu0
    %v2259 = vmul.f32 %v2251, 0.5
    %v2260 = vmul.f32 %v2256, 0.5
    %v2261 = vmul.f32 %v2251, 0.044715
    %v2262 = vmul.f32 %v2256, 0.044715
    %v2263 = vmul.f32 %v2261, %v2251
    %v2264 = vmul.f32 %v2262, %v2256
    %v2265 = vmul.f32 %v2263, %v2251
    %v2266 = vmul.f32 %v2264, %v2256
    %v2267 = vadd.f32 %v2251, %v2265
    %v2268 = vadd.f32 %v2256, %v2266
    %v2269 = vmul.f32 %v2267, 0.7978846
    %v2270 = vmul.f32 %v2268, 0.7978846
    %v2271 = vtanh.pop %v2269
    %v2272 = vtanh.pop %v2270
    %v2273 = vadd.f32 %v2271, 1.0
    %v2274 = vadd.f32 %v2272, 1.0
    %v2275 = vmul.f32 %v2259, %v2273
    %v2276 = vmul.f32 %v2260, %v2274
    %v2277 = vlaneseq
    %v2278 = vshrl.u32 %v2277, 7
    %v2279 = vsub.s32 3, %v2278
    %v2280 = vrot.slane %v1271, %v2279
    %v2282 = vsel %vm1130, %v2275, 0
    %v2285 = vsel %vm1130, %v2276, 0
    %2287 = vmatprep.subr.mxu0 0.0
    %2288 = vmatpush1.msra.mxu0 0.0
    %2289 = vmatprep.subr.mxu0 0.0
    %2290 = vmatpush1.msra.mxu0 0.0
    %2291 = vmatprep.subr.mxu0 0.0
    %2292 = vmatpush1.msra.mxu0 0.0
    %2293 = vmatprep.subr.mxu0 0.0
    %2294 = vmatpush1.msra.mxu0 0.0
    %2295 = vmatprep.subr.mxu0 0.0
    %2296 = vmatpush1.msra.mxu0 0.0
    %2297 = vmatprep.subr.mxu0 0.0
    %2298 = vmatpush1.msra.mxu0 0.0
    %2299 = vmatprep.subr.mxu0 0.0
    %2300 = vmatpush1.msra.mxu0 0.0
    %2301 = vmatprep.subr.mxu0 0.0
    %2302 = vmatpush1.msra.mxu0 0.0
    %2303 = vmatprep.subr.mxu0 0.0
    %2304 = vmatpush1.msra.mxu0 %v1269
    %2305 = vmatprep.subr.mxu0 0.0
    %2306 = vmatpush1.msra.mxu0 %v1268
    %2307 = vmatprep.subr.mxu0 0.0
    %2308 = vmatpush1.msra.mxu0 %v1267
    %2309 = vmatprep.subr.mxu0 0.0
    %2310 = vmatpush1.msra.mxu0 %v1266
    %2311 = vmatprep.subr.mxu0 0.0
    %2312 = vmatpush1.msra.mxu0 %v1265
    %2313 = vmatprep.subr.mxu0 0.0
    %2314 = vmatpush1.msra.mxu0 %v1264
    %2315 = vmatprep.subr.mxu0 0.0
    %2316 = vmatpush1.msra.mxu0 %v1263
    %2317 = vmatprep.subr.mxu0 0.0
    %2318 = vmatpush1.msra.mxu0 %v1262
    %2319 = vmatprep.subr.mxu0 0.0
    %2320 = vmatpush2.msra.mxu0 0.0
    %2321 = vmatprep.subr.mxu0 0.0
    %2322 = vmatpush2.msra.mxu0 0.0
    %2323 = vmatprep.subr.mxu0 0.0
    %2324 = vmatpush2.msra.mxu0 0.0
    %2325 = vmatprep.subr.mxu0 0.0
    %2326 = vmatpush2.msra.mxu0 0.0
    %2327 = vmatprep.subr.mxu0 0.0
    %2328 = vmatpush2.msra.mxu0 0.0
    %2329 = vmatprep.subr.mxu0 0.0
    %2330 = vmatpush2.msra.mxu0 0.0
    %2331 = vmatprep.subr.mxu0 0.0
    %2332 = vmatpush2.msra.mxu0 0.0
    %2333 = vmatprep.subr.mxu0 0.0
    %2334 = vmatpush2.msra.mxu0 0.0
    %2335 = vmatprep.subr.mxu0 0.0
    %2336 = vmatpush2.msra.mxu0 0.0
    %2337 = vmatprep.subr.mxu0 0.0
    %2338 = vmatpush2.msra.mxu0 0.0
    %2339 = vmatprep.subr.mxu0 0.0
    %2340 = vmatpush2.msra.mxu0 0.0
    %2341 = vmatprep.subr.mxu0 0.0
    %2342 = vmatpush2.msra.mxu0 0.0
    %2343 = vmatprep.subr.mxu0 0.0
    %2344 = vmatpush2.msra.mxu0 0.0
    %2345 = vmatprep.subr.mxu0 0.0
    %2346 = vmatpush2.msra.mxu0 0.0
    %2347 = vmatprep.subr.mxu0 0.0
    %2348 = vmatpush2.msra.mxu0 0.0
    %2349 = vmatprep.subr.mxu0 0.0
    %2350 = vmatpush2.msra.mxu0 0.0
    %2351 = vmatprep.mubr.f32.mxu0 0.0
    %2352 = vmatmul.mubr.f32.gmra.mxu0 %v2282
    %v2353 = vpop.f32.mrf.mxu0
    %v2354 = vadd.f32 %v2280, %v2353
    %v2355 = vpop.f32.mrf.mxu0
    %2356 = vmatprep.mubr.f32.mxu0 0.0
    %2357 = vmatmul.mubr.f32.gmra.mxu0 %v2285
    %v2358 = vpop.f32.mrf.mxu0
    %v2359 = vadd.f32 %v2280, %v2358
    %v2360 = vpop.f32.mrf.mxu0
    %2361 = vdwg.mxu0
    %v2362 = vadd.f32 %v2172, %v2354
    %v2363 = vadd.f32 %v2173, %v2359
    %v2364 = vsel %vm29, %v2362, 0.0
    %2365 = vadd.xlane.f32.xlu0 %v2364
    %v2366 = vpop.xlane.xlu0 %2365
    %v2367 = vsel %vm29, %v2363, 0.0
    %2368 = vadd.xlane.f32.xlu0 %v2367
    %v2369 = vpop.xlane.xlu0 %2368
    %v2370 = vmul.f32 %v2366, %v36
    %v2371 = vmul.f32 %v2369, %v36
    %v2372 = vsub.f32 %v2362, %v2370
    %v2373 = vsub.f32 %v2363, %v2371
    %v2374 = vmul.f32 %v2372, %v2372
    %v2375 = vmul.f32 %v2373, %v2373
    %v2376 = vsel %vm29, %v2374, 0.0
    %2377 = vadd.xlane.f32.xlu0 %v2376
    %v2378 = vpop.xlane.xlu0 %2377
    %v2379 = vsel %vm29, %v2375, 0.0
    %2380 = vadd.xlane.f32.xlu0 %v2379
    %v2381 = vpop.xlane.xlu0 %2380
    %v2382 = vmul.f32 %v2378, %v36
    %v2383 = vmul.f32 %v2381, %v36
    %v2384 = vadd.f32 %v2382, 1e-12
    %v2385 = vadd.f32 %v2383, 1e-12
    %v2386 = vrsqrt.pop %v2384
    %v2387 = vrsqrt.pop %v2385
    %v2388 = vmul.f32 %v2372, %v2386
    %v2389 = vmul.f32 %v2373, %v2387
    %v2390 = vlaneseq
    %v2391 = vshrl.u32 %v2390, 7
    %v2392 = vsub.s32 6, %v2391
    %v2393 = vrot.slane %v1271, %v2392
    %v2394 = vmul.f32 %v2388, %v2393
    %v2395 = vmul.f32 %v2389, %v2393
    %v2396 = vlaneseq
    %v2397 = vshrl.u32 %v2396, 7
    %v2398 = vsub.s32 7, %v2397
    %v2399 = vrot.slane %v1271, %v2398
    %v2400 = vadd.f32 %v2394, %v2399
    %v2401 = vadd.f32 %v2395, %v2399
    %2402 = vst.msk [vmem:[#allocation2] sm:$0xff] %vm29, %v2400
    %2403 = vst.msk [vmem:[#allocation2 + $0x8] sm:$0xff] %vm29, %v2401
    // Predicated region
    $region26: #{question_encoder.1} parent=1 // pred_check
      _
    $region27: #{question_encoder.1} parent=1 // pred_check_branch
      %2405 = sbr.rel (0) target = $region29
    $region28: #{question_encoder.1} parent=1 // pred_region
      %s2407 = ssub.s32 256, 256
      %2408 = vsyncadd [#allocation3], %s2407
      %s2409 = sshll.u32 [#allocation2], 4
      %s2410 = int_to_ptr.vmem [resolvable:$true] %s2409
      %2415 = dma.vmem_to_hbm [thread:$0]  %s2410, 256, %s6, [#allocation3], 128, 128, 8
    $region29: #{question_encoder.1} parent=1 // pred_fallthru
      _
    // Predicated region
    $region30: #{question_encoder.1} parent=1 // pred_check
      _
    $region31: #{question_encoder.1} parent=1 // pred_check_branch
      %2417 = sbr.rel (0) target = $region33
    $region32: #{question_encoder.1} parent=1 // pred_region
      %2418 = dma.done [#allocation3], 256
    $region33: #{question_encoder.1} parent=1 // pred_fallthru
      _
    %2419 = vsyncpa [#allocation3], 1

</llo_original>
